<compile_context>
chip_gen: v7x
topology: tpu7x:2x2x1
jax: 0.10.0
libtpu: 0.0.40
codegen_flags: <defaults>
</compile_context>

<pallas_src>
import functools

import numpy as np
import jax
import jax.numpy as jnp
from jax import lax
from jax.experimental import pallas as pl
from jax.experimental.pallas import tpu as pltpu


def _round_up(x, m):
    return (x + m - 1) // m * m


# ---------------------------------------------------------------------------
# Pallas kernels
# ---------------------------------------------------------------------------
def _conv1_pool_tanh_kernel(w_ref, b_ref, p_ref, o_ref, *, mp):
    """out = tanh(maxpool2x2(conv1(x)) + b), lane-dense (C1, mp) output.

    p_ref: (Cin*25, 4*mp) bf16 -- the four 2x2 pool-window offsets are
    concatenated along the lane axis (each group mp wide, mp % 128 == 0), so a
    single MXU dot covers all of them and the pool is a max of four aligned
    lane slices.  Bias-after-max and tanh-after-max are valid (monotonicity).
    """
    z = jnp.dot(w_ref[...], p_ref[...], preferred_element_type=jnp.float32)
    m = jnp.maximum(jnp.maximum(z[:, 0:mp], z[:, mp:2 * mp]),
                    jnp.maximum(z[:, 2 * mp:3 * mp], z[:, 3 * mp:4 * mp]))
    o_ref[...] = jnp.tanh(m + b_ref[...]).astype(o_ref.dtype)


def _conv2_pool_mlp_kernel(p_ref, w2_ref, b2_ref, w1x_ref, b1f_ref,
                           w2f_ref, b2f_ref, w3f_ref, b3f_ref, o_ref,
                           *, rows, batch):
    """conv2 + maxpool2x2 + tanh + (NCHW flatten) + fc1/tanh + fc2/tanh + fc3.

    p_ref: (4*rows, C1*25) bf16 transposed conv2 patches.  Row layout is
    (pool_group, pooled_pixel, batch), so the pool is a max of four
    tile-aligned row blocks, and the flatten is absorbed into fc1 by holding
    fc1's weight per pooled spatial position (w1x[s] : (C2, F1)).
    All intermediates live in VMEM / vregs; only the (B, num_classes) logits
    are written back to HBM.
    """
    # conv2 matmul (single dot over all pool groups), f32 accumulation.
    z = jnp.dot(p_ref[...], w2_ref[...], preferred_element_type=jnp.float32)
    m = jnp.maximum(jnp.maximum(z[0:rows], z[rows:2 * rows]),
                    jnp.maximum(z[2 * rows:3 * rows], z[3 * rows:4 * rows]))
    a2 = jnp.tanh(m + b2_ref[...]).astype(jnp.bfloat16)          # (rows, C2)

    # fc1 with the NCHW flatten folded in: one tiny MXU dot per pooled spatial
    # position (25 total), accumulated in f32.
    h = b1f_ref[...]                                             # (1, F1)
    for s in range(25):
        a2_s = a2[s * batch:(s + 1) * batch, :]                  # (B, C2)
        h = h + jnp.dot(a2_s, w1x_ref[s],
                        preferred_element_type=jnp.float32)      # (B, F1)
    h1 = jnp.tanh(h).astype(jnp.bfloat16)

    h2 = jnp.tanh(jnp.dot(h1, w2f_ref[...],
                          preferred_element_type=jnp.float32) + b2f_ref[...])
    h2 = h2.astype(jnp.bfloat16)
    o_ref[...] = (jnp.dot(h2, w3f_ref[...],
                          preferred_element_type=jnp.float32)
                  + b3f_ref[...]).astype(o_ref.dtype)


# ---------------------------------------------------------------------------
# Pallas wrappers
# ---------------------------------------------------------------------------
def _vmem_specs(n):
    return [pl.BlockSpec(memory_space=pltpu.MemorySpace.VMEM)] * n


def _bytes(*arrs):
    return int(sum(a.size * a.dtype.itemsize for a in arrs))


def conv1_pool_tanh(p1, w1m, b1, mp):
    """w1m:(C1, Cin*25) bf16, b1:(C1,1) f32, p1:(Cin*25, 4*mp) bf16 -> (C1, mp) bf16."""
    c1, k = w1m.shape
    kern = functools.partial(_conv1_pool_tanh_kernel, mp=mp)
    return pl.pallas_call(
        kern,
        out_shape=jax.ShapeDtypeStruct((c1, mp), jnp.bfloat16),
        in_specs=_vmem_specs(3),
        out_specs=pl.BlockSpec(memory_space=pltpu.MemorySpace.VMEM),
        cost_estimate=pl.CostEstimate(
            flops=2 * c1 * k * 4 * mp + 4 * c1 * mp,
            transcendentals=c1 * mp,
            bytes_accessed=_bytes(w1m, b1, p1) + c1 * mp * 2),
    )(w1m, b1, p1)


def conv2_pool_mlp(p2t, pk, rows, batch, num_classes):
    """Fused conv2+pool+tanh + classifier; returns (batch, num_classes) f32."""
    kern = functools.partial(_conv2_pool_mlp_kernel, rows=rows, batch=batch)
    kdim, c2 = pk["w2t"].shape
    f1 = pk["w2f"].shape[0]
    f2 = pk["w3f"].shape[0]
    flops = (2 * 4 * rows * kdim * c2 + 2 * 25 * batch * c2 * f1
             + 2 * batch * f1 * f2 + 2 * batch * f2 * num_classes)
    ins = (p2t, pk["w2t"], pk["b2"], pk["w1x"], pk["b1f"],
           pk["w2f"], pk["b2f"], pk["w3f"], pk["b3f"])
    return pl.pallas_call(
        kern,
        out_shape=jax.ShapeDtypeStruct((batch, num_classes), jnp.float32),
        in_specs=_vmem_specs(len(ins)),
        out_specs=pl.BlockSpec(memory_space=pltpu.MemorySpace.VMEM),
        cost_estimate=pl.CostEstimate(
            flops=flops,
            transcendentals=rows * c2 + batch * (f1 + f2),
            bytes_accessed=_bytes(*ins) + batch * num_classes * 4),
    )(*ins)


# ---------------------------------------------------------------------------
# Constant gather indices (trace-time numpy; the only inter-kernel glue)
# ---------------------------------------------------------------------------
def _conv1_patch_indices(batch, cin, h, w):
    """idx[(c*25+i*5+j), g*mp + (b*hp*wp + y*wp + x)] = flat index of
    x[b, c, 2y+dy+i, 2x+dx+j], g = dy*2+dx."""
    hp, wp = (h - 4) // 2, (w - 4) // 2
    m = batch * hp * wp
    mp = _round_up(m, 128)
    b_, y_, x_ = np.meshgrid(np.arange(batch), np.arange(hp), np.arange(wp),
                             indexing="ij")
    b_, y_, x_ = b_.ravel(), y_.ravel(), x_.ravel()
    idx = np.zeros((cin * 25, 4 * mp), np.int32)
    for g in range(4):
        dy, dx = g // 2, g % 2
        for c in range(cin):
            for i in range(5):
                for j in range(5):
                    u = 2 * y_ + dy + i
                    v = 2 * x_ + dx + j
                    idx[c * 25 + i * 5 + j, g * mp:g * mp + m] = (
                        ((b_ * cin + c) * h + u) * w + v)
    return idx, mp


def _conv2_patch_indices(batch, c1, mp, hp, wp):
    """idx[g*rows + (y*5+x)*batch + b, c*25+i*5+j] = flat index (into the
    (c1, mp) conv1 output) of a1[c, b, 2y+dy+i, 2x+dx+j]."""
    rows = _round_up(25 * batch, 16)
    cc = np.repeat(np.arange(c1), 25)
    ii = np.tile(np.repeat(np.arange(5), 5), c1)
    jj = np.tile(np.arange(5), 5 * c1)
    idx = np.zeros((4 * rows, c1 * 25), np.int32)
    for g in range(4):
        dy, dx = g // 2, g % 2
        for y in range(5):
            for x in range(5):
                for b in range(batch):
                    r = g * rows + (y * 5 + x) * batch + b
                    u = 2 * y + dy + ii
                    v = 2 * x + dx + jj
                    idx[r, :] = cc * mp + b * hp * wp + u * wp + v
    return idx, rows


# ---------------------------------------------------------------------------
# Parameters + forward
# ---------------------------------------------------------------------------
def init_lenet5_params(key, num_classes, grayscale):
    in_c = 1 if grayscale else 3
    c1o, c2o = 6 * in_c, 16 * in_c
    f1_in, f1_out, f2_out = 16 * 5 * 5 * in_c, 120 * in_c, 84 * in_c

    def uniform(k, shape, fan_in):
        bound = 1.0 / np.sqrt(fan_in)
        return jax.random.uniform(k, shape, jnp.float32, -bound, bound)

    ks = jax.random.split(key, 10)
    return {
        "conv1_w": uniform(ks[0], (c1o, in_c, 5, 5), in_c * 25),
        "conv1_b": uniform(ks[1], (c1o,), in_c * 25),
        "conv2_w": uniform(ks[2], (c2o, c1o, 5, 5), c1o * 25),
        "conv2_b": uniform(ks[3], (c2o,), c1o * 25),
        "fc1_w": uniform(ks[4], (f1_out, f1_in), f1_in),
        "fc1_b": uniform(ks[5], (f1_out,), f1_in),
        "fc2_w": uniform(ks[6], (f2_out, f1_out), f1_out),
        "fc2_b": uniform(ks[7], (f2_out,), f1_out),
        "fc3_w": uniform(ks[8], (num_classes, f2_out), f2_out),
        "fc3_b": uniform(ks[9], (num_classes,), f2_out),
    }


def pack_params(params):
    """One-time re-layout of the PyTorch-style parameters for the kernels.

    Matmul operands are pre-cast to bf16 (MXU-native on v6e/v7x, halves DMA
    bytes); biases stay f32 so all VPU/EUP epilogue math is f32 (v5e has no
    bf16 VPU/EUP).  fc2/fc3 weights are stored (in, out) so no in-kernel
    transpose is emitted; fc1 is re-laid-out per pooled spatial position so
    the NCHW flatten is absorbed into the fused kernel.
    """
    bf16, f32 = jnp.bfloat16, jnp.float32
    c1w, c2w = params["conv1_w"], params["conv2_w"]
    c1o, cin = c1w.shape[0], c1w.shape[1]
    c2o = c2w.shape[0]
    f1w, f2w, f3w = params["fc1_w"], params["fc2_w"], params["fc3_w"]
    f1o, f2o = f1w.shape[0], f2w.shape[0]
    return {
        "w1m": c1w.reshape(c1o, cin * 25).astype(bf16),
        "b1": params["conv1_b"].reshape(c1o, 1).astype(f32),
        "w2t": c2w.reshape(c2o, c1o * 25).T.astype(bf16),            # (C1*25, C2)
        "b2": params["conv2_b"].reshape(1, c2o).astype(f32),
        # fc1_w[n, c*25 + s]  ->  w1x[s, c, n]
        "w1x": f1w.reshape(f1o, c2o, 25).transpose(2, 1, 0).astype(bf16),
        "b1f": params["fc1_b"].reshape(1, f1o).astype(f32),
        "w2f": f2w.T.astype(bf16),                                    # (F1, F2)
        "b2f": params["fc2_b"].reshape(1, f2o).astype(f32),
        "w3f": f3w.T.astype(bf16),                                    # (F2, NC)
        "b3f": params["fc3_b"].reshape(1, f3w.shape[0]).astype(f32),
    }


def lenet5_forward(packed, x):
    batch, cin, h, w = x.shape
    assert h == 32 and w == 32, "LeNet-5 classifier implies 32x32 inputs"
    c1 = packed["w1m"].shape[0]
    num_classes = packed["b3f"].shape[1]
    hp, wp = (h - 4) // 2, (w - 4) // 2                     # 14, 14

    idx1, mp = _conv1_patch_indices(batch, cin, h, w)
    idx2, rows = _conv2_patch_indices(batch, c1, mp, hp, wp)

    # glue 1: ONE constant-index gather builds conv1's pool-grouped patches.
    p1 = jnp.take(x.reshape(-1), jnp.asarray(idx1), mode="clip")
    p1 = p1.astype(jnp.bfloat16)

    # kernel 1: conv1 matmul + bias + 2x2 max-pool + tanh (single MXU dot).
    a1 = conv1_pool_tanh(p1, packed["w1m"], packed["b1"], mp)   # (C1, mp) bf16

    # glue 2: ONE constant-index gather builds conv2's transposed patches.
    p2t = jnp.take(a1.reshape(-1), jnp.asarray(idx2), mode="clip")

    # kernel 2: conv2 + pool + tanh + flatten + fc1/fc2/fc3, fully fused.
    return conv2_pool_mlp(p2t, packed, rows, batch, num_classes)


def lenet5_reference(params, x):
    """Pure-JAX reference (mirrors PyTorch semantics) for a correctness check."""
    def conv(x, w, b):
        y = lax.conv_general_dilated(
            x, w, (1, 1), "VALID", dimension_numbers=("NCHW", "OIHW", "NCHW"))
        return jnp.tanh(y + b[None, :, None, None])

    def pool(x):
        return lax.reduce_window(x, -jnp.inf, lax.max,
                                 (1, 1, 2, 2), (1, 1, 2, 2), "VALID")

    x = pool(conv(x, params["conv1_w"], params["conv1_b"]))
    x = pool(conv(x, params["conv2_w"], params["conv2_b"]))
    x = x.reshape(x.shape[0], -1)
    x = jnp.tanh(x @ params["fc1_w"].T + params["fc1_b"])
    x = jnp.tanh(x @ params["fc2_w"].T + params["fc2_b"])
    return x @ params["fc3_w"].T + params["fc3_b"]


# ---------------------------------------------------------------------------
if __name__ == "__main__":
    num_classes = 10
    grayscale = True            # in_channels = 1 (classic LeNet-5)
    batch = 2

    key = jax.random.PRNGKey(0)
    k_params, k_x = jax.random.split(key)
    params = init_lenet5_params(k_params, num_classes, grayscale)
    # LeNet-5 classifier (16*5*5*in_c inputs) implies 32x32 spatial, padding=0.
    x = jax.random.normal(k_x, (batch, 1, 32, 32), jnp.float32)

    packed = pack_params(params)            # one-time weight re-layout
    fwd = jax.jit(lenet5_forward)
    ref_fn = jax.jit(lenet5_reference)

    out = jax.block_until_ready(fwd(packed, x))
    ref = jax.block_until_ready(ref_fn(params, x))

    assert out.shape == (batch, num_classes)
    # bf16 MXU operands (per perf guidance) => tolerance looser than pure-f32.
    np.testing.assert_allclose(np.asarray(out), np.asarray(ref),
                               rtol=5e-2, atol=1e-2)
    print("KERNEL_OK")
</pallas_src>

<mosaic_0001>
module attributes {stable_mosaic.version = 11 : i64} {
  func.func @_conv1_pool_tanh_kernel(%arg0: memref<6x25xbf16, #tpu.memory_space<vmem>>, %arg1: memref<6x1xf32, #tpu.memory_space<vmem>>, %arg2: memref<25x2048xbf16, #tpu.memory_space<vmem>>, %arg3: memref<6x512xbf16, #tpu.memory_space<vmem>>) attributes {dimension_semantics = [], scalar_prefetch = 0 : i64, scratch_operands = 0 : i64, tpu.core_type = #tpu.core_type<tc>} {
    %c0 = arith.constant 0 : index
    %c0_0 = arith.constant 0 : index
    %0 = vector.load %arg0[%c0, %c0_0] : memref<6x25xbf16, #tpu.memory_space<vmem>>, vector<6x25xbf16>
    %c0_1 = arith.constant 0 : index
    %c0_2 = arith.constant 0 : index
    %1 = vector.load %arg2[%c0_1, %c0_2] : memref<25x2048xbf16, #tpu.memory_space<vmem>>, vector<25x2048xbf16>
    %cst = arith.constant dense<0.000000e+00> : vector<6x2048xf32>
    %2 = tpu.matmul %0, %1, %cst {dimension_numbers = #tpu.dot_dimension_numbers<[1], [0], [0], [1], [0, 0, 1, 1], [], []>} : vector<6x25xbf16>, vector<25x2048xbf16>, vector<6x2048xf32> -> vector<6x2048xf32>
    %3 = vector.extract_strided_slice %2 {offsets = [0, 0], sizes = [6, 512], strides = [1, 1]} : vector<6x2048xf32> to vector<6x512xf32>
    %4 = vector.extract_strided_slice %2 {offsets = [0, 512], sizes = [6, 512], strides = [1, 1]} : vector<6x2048xf32> to vector<6x512xf32>
    %5 = arith.maximumf %3, %4 : vector<6x512xf32>
    %6 = vector.extract_strided_slice %2 {offsets = [0, 1024], sizes = [6, 512], strides = [1, 1]} : vector<6x2048xf32> to vector<6x512xf32>
    %7 = vector.extract_strided_slice %2 {offsets = [0, 1536], sizes = [6, 512], strides = [1, 1]} : vector<6x2048xf32> to vector<6x512xf32>
    %8 = arith.maximumf %6, %7 : vector<6x512xf32>
    %9 = arith.maximumf %5, %8 : vector<6x512xf32>
    %c0_3 = arith.constant 0 : index
    %c0_4 = arith.constant 0 : index
    %10 = vector.load %arg1[%c0_3, %c0_4] : memref<6x1xf32, #tpu.memory_space<vmem>>, vector<6x1xf32>
    %11 = vector.broadcast %10 : vector<6x1xf32> to vector<6x512xf32>
    %12 = arith.addf %9, %11 : vector<6x512xf32>
    %13 = math.tanh %12 : vector<6x512xf32>
    %14 = arith.truncf %13 : vector<6x512xf32> to vector<6x512xbf16>
    %c0_5 = arith.constant 0 : index
    %c0_6 = arith.constant 0 : index
    %15 = vector.load %arg3[%c0_5, %c0_6] : memref<6x512xbf16, #tpu.memory_space<vmem>>, vector<6x512xbf16>
    tpu.vector_store %arg3[%c0_5, %c0_6], %14 {strides = array<i32>} : memref<6x512xbf16, #tpu.memory_space<vmem>>, vector<6x512xbf16>,
    return
  }
}

module attributes {stable_mosaic.version = 11 : i64} {
  func.func @_conv2_pool_mlp_kernel(%arg0: memref<256x150xbf16, #tpu.memory_space<vmem>>, %arg1: memref<150x16xbf16, #tpu.memory_space<vmem>>, %arg2: memref<1x16xf32, #tpu.memory_space<vmem>>, %arg3: memref<25x16x120xbf16, #tpu.memory_space<vmem>>, %arg4: memref<1x120xf32, #tpu.memory_space<vmem>>, %arg5: memref<120x84xbf16, #tpu.memory_space<vmem>>, %arg6: memref<1x84xf32, #tpu.memory_space<vmem>>, %arg7: memref<84x10xbf16, #tpu.memory_space<vmem>>, %arg8: memref<1x10xf32, #tpu.memory_space<vmem>>, %arg9: memref<2x10xf32, #tpu.memory_space<vmem>>) attributes {dimension_semantics = [], scalar_prefetch = 0 : i64, scratch_operands = 0 : i64, tpu.core_type = #tpu.core_type<tc>} {
    %c0 = arith.constant 0 : index
    %c0_0 = arith.constant 0 : index
    %0 = vector.load %arg0[%c0, %c0_0] : memref<256x150xbf16, #tpu.memory_space<vmem>>, vector<256x150xbf16>
    %c0_1 = arith.constant 0 : index
    %c0_2 = arith.constant 0 : index
    %1 = vector.load %arg1[%c0_1, %c0_2] : memref<150x16xbf16, #tpu.memory_space<vmem>>, vector<150x16xbf16>
    %cst = arith.constant dense<0.000000e+00> : vector<256x16xf32>
    %2 = tpu.matmul %0, %1, %cst {dimension_numbers = #tpu.dot_dimension_numbers<[1], [0], [0], [1], [0, 0, 1, 1], [], []>} : vector<256x150xbf16>, vector<150x16xbf16>, vector<256x16xf32> -> vector<256x16xf32>
    %3 = vector.extract_strided_slice %2 {offsets = [0, 0], sizes = [64, 16], strides = [1, 1]} : vector<256x16xf32> to vector<64x16xf32>
    %4 = vector.extract_strided_slice %2 {offsets = [64, 0], sizes = [64, 16], strides = [1, 1]} : vector<256x16xf32> to vector<64x16xf32>
    %5 = arith.maximumf %3, %4 : vector<64x16xf32>
    %6 = vector.extract_strided_slice %2 {offsets = [128, 0], sizes = [64, 16], strides = [1, 1]} : vector<256x16xf32> to vector<64x16xf32>
    %7 = vector.extract_strided_slice %2 {offsets = [192, 0], sizes = [64, 16], strides = [1, 1]} : vector<256x16xf32> to vector<64x16xf32>
    %8 = arith.maximumf %6, %7 : vector<64x16xf32>
    %9 = arith.maximumf %5, %8 : vector<64x16xf32>
    %c0_3 = arith.constant 0 : index
    %c0_4 = arith.constant 0 : index
    %10 = vector.load %arg2[%c0_3, %c0_4] : memref<1x16xf32, #tpu.memory_space<vmem>>, vector<1x16xf32>
    %11 = vector.broadcast %10 : vector<1x16xf32> to vector<64x16xf32>
    %12 = arith.addf %9, %11 : vector<64x16xf32>
    %13 = math.tanh %12 : vector<64x16xf32>
    %14 = arith.truncf %13 : vector<64x16xf32> to vector<64x16xbf16>
    %c0_5 = arith.constant 0 : index
    %c0_6 = arith.constant 0 : index
    %15 = vector.load %arg4[%c0_5, %c0_6] : memref<1x120xf32, #tpu.memory_space<vmem>>, vector<1x120xf32>
    %16 = vector.extract_strided_slice %14 {offsets = [0, 0], sizes = [2, 16], strides = [1, 1]} : vector<64x16xbf16> to vector<2x16xbf16>
    %c0_7 = arith.constant 0 : index
    %c0_8 = arith.constant 0 : index
    %c0_9 = arith.constant 0 : index
    %17 = vector.load %arg3[%c0_7, %c0_8, %c0_9] : memref<25x16x120xbf16, #tpu.memory_space<vmem>>, vector<1x16x120xbf16>
    %18 = vector.shape_cast %17 : vector<1x16x120xbf16> to vector<16x120xbf16>
    %cst_10 = arith.constant dense<0.000000e+00> : vector<2x120xf32>
    %19 = tpu.matmul %16, %18, %cst_10 {dimension_numbers = #tpu.dot_dimension_numbers<[1], [0], [0], [1], [0, 0, 1, 1], [], []>} : vector<2x16xbf16>, vector<16x120xbf16>, vector<2x120xf32> -> vector<2x120xf32>
    %20 = vector.broadcast %15 : vector<1x120xf32> to vector<2x120xf32>
    %21 = arith.addf %20, %19 : vector<2x120xf32>
    %22 = vector.extract_strided_slice %14 {offsets = [2, 0], sizes = [2, 16], strides = [1, 1]} : vector<64x16xbf16> to vector<2x16xbf16>
    %c1 = arith.constant 1 : index
    %c0_11 = arith.constant 0 : index
    %c0_12 = arith.constant 0 : index
    %23 = vector.load %arg3[%c1, %c0_11, %c0_12] : memref<25x16x120xbf16, #tpu.memory_space<vmem>>, vector<1x16x120xbf16>
    %24 = vector.shape_cast %23 : vector<1x16x120xbf16> to vector<16x120xbf16>
    %cst_13 = arith.constant dense<0.000000e+00> : vector<2x120xf32>
    %25 = tpu.matmul %22, %24, %cst_13 {dimension_numbers = #tpu.dot_dimension_numbers<[1], [0], [0], [1], [0, 0, 1, 1], [], []>} : vector<2x16xbf16>, vector<16x120xbf16>, vector<2x120xf32> -> vector<2x120xf32>
    %26 = arith.addf %21, %25 : vector<2x120xf32>
    %27 = vector.extract_strided_slice %14 {offsets = [4, 0], sizes = [2, 16], strides = [1, 1]} : vector<64x16xbf16> to vector<2x16xbf16>
    %c2 = arith.constant 2 : index
    %c0_14 = arith.constant 0 : index
    %c0_15 = arith.constant 0 : index
    %28 = vector.load %arg3[%c2, %c0_14, %c0_15] : memref<25x16x120xbf16, #tpu.memory_space<vmem>>, vector<1x16x120xbf16>
    %29 = vector.shape_cast %28 : vector<1x16x120xbf16> to vector<16x120xbf16>
    %cst_16 = arith.constant dense<0.000000e+00> : vector<2x120xf32>
    %30 = tpu.matmul %27, %29, %cst_16 {dimension_numbers = #tpu.dot_dimension_numbers<[1], [0], [0], [1], [0, 0, 1, 1], [], []>} : vector<2x16xbf16>, vector<16x120xbf16>, vector<2x120xf32> -> vector<2x120xf32>
    %31 = arith.addf %26, %30 : vector<2x120xf32>
    %32 = vector.extract_strided_slice %14 {offsets = [6, 0], sizes = [2, 16], strides = [1, 1]} : vector<64x16xbf16> to vector<2x16xbf16>
    %c3 = arith.constant 3 : index
    %c0_17 = arith.constant 0 : index
    %c0_18 = arith.constant 0 : index
    %33 = vector.load %arg3[%c3, %c0_17, %c0_18] : memref<25x16x120xbf16, #tpu.memory_space<vmem>>, vector<1x16x120xbf16>
    %34 = vector.shape_cast %33 : vector<1x16x120xbf16> to vector<16x120xbf16>
    %cst_19 = arith.constant dense<0.000000e+00> : vector<2x120xf32>
    %35 = tpu.matmul %32, %34, %cst_19 {dimension_numbers = #tpu.dot_dimension_numbers<[1], [0], [0], [1], [0, 0, 1, 1], [], []>} : vector<2x16xbf16>, vector<16x120xbf16>, vector<2x120xf32> -> vector<2x120xf32>
    %36 = arith.addf %31, %35 : vector<2x120xf32>
    %37 = vector.extract_strided_slice %14 {offsets = [8, 0], sizes = [2, 16], strides = [1, 1]} : vector<64x16xbf16> to vector<2x16xbf16>
    %c4 = arith.constant 4 : index
    %c0_20 = arith.constant 0 : index
    %c0_21 = arith.constant 0 : index
    %38 = vector.load %arg3[%c4, %c0_20, %c0_21] : memref<25x16x120xbf16, #tpu.memory_space<vmem>>, vector<1x16x120xbf16>
    %39 = vector.shape_cast %38 : vector<1x16x120xbf16> to vector<16x120xbf16>
    %cst_22 = arith.constant dense<0.000000e+00> : vector<2x120xf32>
    %40 = tpu.matmul %37, %39, %cst_22 {dimension_numbers = #tpu.dot_dimension_numbers<[1], [0], [0], [1], [0, 0, 1, 1], [], []>} : vector<2x16xbf16>, vector<16x120xbf16>, vector<2x120xf32> -> vector<2x120xf32>
    %41 = arith.addf %36, %40 : vector<2x120xf32>
    %42 = vector.extract_strided_slice %14 {offsets = [10, 0], sizes = [2, 16], strides = [1, 1]} : vector<64x16xbf16> to vector<2x16xbf16>
    %c5 = arith.constant 5 : index
    %c0_23 = arith.constant 0 : index
    %c0_24 = arith.constant 0 : index
    %43 = vector.load %arg3[%c5, %c0_23, %c0_24] : memref<25x16x120xbf16, #tpu.memory_space<vmem>>, vector<1x16x120xbf16>
    %44 = vector.shape_cast %43 : vector<1x16x120xbf16> to vector<16x120xbf16>
    %cst_25 = arith.constant dense<0.000000e+00> : vector<2x120xf32>
    %45 = tpu.matmul %42, %44, %cst_25 {dimension_numbers = #tpu.dot_dimension_numbers<[1], [0], [0], [1], [0, 0, 1, 1], [], []>} : vector<2x16xbf16>, vector<16x120xbf16>, vector<2x120xf32> -> vector<2x120xf32>
    %46 = arith.addf %41, %45 : vector<2x120xf32>
    %47 = vector.extract_strided_slice %14 {offsets = [12, 0], sizes = [2, 16], strides = [1, 1]} : vector<64x16xbf16> to vector<2x16xbf16>
    %c6 = arith.constant 6 : index
    %c0_26 = arith.constant 0 : index
    %c0_27 = arith.constant 0 : index
    %48 = vector.load %arg3[%c6, %c0_26, %c0_27] : memref<25x16x120xbf16, #tpu.memory_space<vmem>>, vector<1x16x120xbf16>
    %49 = vector.shape_cast %48 : vector<1x16x120xbf16> to vector<16x120xbf16>
    %cst_28 = arith.constant dense<0.000000e+00> : vector<2x120xf32>
    %50 = tpu.matmul %47, %49, %cst_28 {dimension_numbers = #tpu.dot_dimension_numbers<[1], [0], [0], [1], [0, 0, 1, 1], [], []>} : vector<2x16xbf16>, vector<16x120xbf16>, vector<2x120xf32> -> vector<2x120xf32>
    %51 = arith.addf %46, %50 : vector<2x120xf32>
    %52 = vector.extract_strided_slice %14 {offsets = [14, 0], sizes = [2, 16], strides = [1, 1]} : vector<64x16xbf16> to vector<2x16xbf16>
    %c7 = arith.constant 7 : index
    %c0_29 = arith.constant 0 : index
    %c0_30 = arith.constant 0 : index
    %53 = vector.load %arg3[%c7, %c0_29, %c0_30] : memref<25x16x120xbf16, #tpu.memory_space<vmem>>, vector<1x16x120xbf16>
    %54 = vector.shape_cast %53 : vector<1x16x120xbf16> to vector<16x120xbf16>
    %cst_31 = arith.constant dense<0.000000e+00> : vector<2x120xf32>
    %55 = tpu.matmul %52, %54, %cst_31 {dimension_numbers = #tpu.dot_dimension_numbers<[1], [0], [0], [1], [0, 0, 1, 1], [], []>} : vector<2x16xbf16>, vector<16x120xbf16>, vector<2x120xf32> -> vector<2x120xf32>
    %56 = arith.addf %51, %55 : vector<2x120xf32>
    %57 = vector.extract_strided_slice %14 {offsets = [16, 0], sizes = [2, 16], strides = [1, 1]} : vector<64x16xbf16> to vector<2x16xbf16>
    %c8 = arith.constant 8 : index
    %c0_32 = arith.constant 0 : index
    %c0_33 = arith.constant 0 : index
    %58 = vector.load %arg3[%c8, %c0_32, %c0_33] : memref<25x16x120xbf16, #tpu.memory_space<vmem>>, vector<1x16x120xbf16>
    %59 = vector.shape_cast %58 : vector<1x16x120xbf16> to vector<16x120xbf16>
    %cst_34 = arith.constant dense<0.000000e+00> : vector<2x120xf32>
    %60 = tpu.matmul %57, %59, %cst_34 {dimension_numbers = #tpu.dot_dimension_numbers<[1], [0], [0], [1], [0, 0, 1, 1], [], []>} : vector<2x16xbf16>, vector<16x120xbf16>, vector<2x120xf32> -> vector<2x120xf32>
    %61 = arith.addf %56, %60 : vector<2x120xf32>
    %62 = vector.extract_strided_slice %14 {offsets = [18, 0], sizes = [2, 16], strides = [1, 1]} : vector<64x16xbf16> to vector<2x16xbf16>
    %c9 = arith.constant 9 : index
    %c0_35 = arith.constant 0 : index
    %c0_36 = arith.constant 0 : index
    %63 = vector.load %arg3[%c9, %c0_35, %c0_36] : memref<25x16x120xbf16, #tpu.memory_space<vmem>>, vector<1x16x120xbf16>
    %64 = vector.shape_cast %63 : vector<1x16x120xbf16> to vector<16x120xbf16>
    %cst_37 = arith.constant dense<0.000000e+00> : vector<2x120xf32>
    %65 = tpu.matmul %62, %64, %cst_37 {dimension_numbers = #tpu.dot_dimension_numbers<[1], [0], [0], [1], [0, 0, 1, 1], [], []>} : vector<2x16xbf16>, vector<16x120xbf16>, vector<2x120xf32> -> vector<2x120xf32>
    %66 = arith.addf %61, %65 : vector<2x120xf32>
    %67 = vector.extract_strided_slice %14 {offsets = [20, 0], sizes = [2, 16], strides = [1, 1]} : vector<64x16xbf16> to vector<2x16xbf16>
    %c10 = arith.constant 10 : index
    %c0_38 = arith.constant 0 : index
    %c0_39 = arith.constant 0 : index
    %68 = vector.load %arg3[%c10, %c0_38, %c0_39] : memref<25x16x120xbf16, #tpu.memory_space<vmem>>, vector<1x16x120xbf16>
    %69 = vector.shape_cast %68 : vector<1x16x120xbf16> to vector<16x120xbf16>
    %cst_40 = arith.constant dense<0.000000e+00> : vector<2x120xf32>
    %70 = tpu.matmul %67, %69, %cst_40 {dimension_numbers = #tpu.dot_dimension_numbers<[1], [0], [0], [1], [0, 0, 1, 1], [], []>} : vector<2x16xbf16>, vector<16x120xbf16>, vector<2x120xf32> -> vector<2x120xf32>
    %71 = arith.addf %66, %70 : vector<2x120xf32>
    %72 = vector.extract_strided_slice %14 {offsets = [22, 0], sizes = [2, 16], strides = [1, 1]} : vector<64x16xbf16> to vector<2x16xbf16>
    %c11 = arith.constant 11 : index
    %c0_41 = arith.constant 0 : index
    %c0_42 = arith.constant 0 : index
    %73 = vector.load %arg3[%c11, %c0_41, %c0_42] : memref<25x16x120xbf16, #tpu.memory_space<vmem>>, vector<1x16x120xbf16>
    %74 = vector.shape_cast %73 : vector<1x16x120xbf16> to vector<16x120xbf16>
    %cst_43 = arith.constant dense<0.000000e+00> : vector<2x120xf32>
    %75 = tpu.matmul %72, %74, %cst_43 {dimension_numbers = #tpu.dot_dimension_numbers<[1], [0], [0], [1], [0, 0, 1, 1], [], []>} : vector<2x16xbf16>, vector<16x120xbf16>, vector<2x120xf32> -> vector<2x120xf32>
    %76 = arith.addf %71, %75 : vector<2x120xf32>
    %77 = vector.extract_strided_slice %14 {offsets = [24, 0], sizes = [2, 16], strides = [1, 1]} : vector<64x16xbf16> to vector<2x16xbf16>
    %c12 = arith.constant 12 : index
    %c0_44 = arith.constant 0 : index
    %c0_45 = arith.constant 0 : index
    %78 = vector.load %arg3[%c12, %c0_44, %c0_45] : memref<25x16x120xbf16, #tpu.memory_space<vmem>>, vector<1x16x120xbf16>
    %79 = vector.shape_cast %78 : vector<1x16x120xbf16> to vector<16x120xbf16>
    %cst_46 = arith.constant dense<0.000000e+00> : vector<2x120xf32>
    %80 = tpu.matmul %77, %79, %cst_46 {dimension_numbers = #tpu.dot_dimension_numbers<[1], [0], [0], [1], [0, 0, 1, 1], [], []>} : vector<2x16xbf16>, vector<16x120xbf16>, vector<2x120xf32> -> vector<2x120xf32>
    %81 = arith.addf %76, %80 : vector<2x120xf32>
    %82 = vector.extract_strided_slice %14 {offsets = [26, 0], sizes = [2, 16], strides = [1, 1]} : vector<64x16xbf16> to vector<2x16xbf16>
    %c13 = arith.constant 13 : index
    %c0_47 = arith.constant 0 : index
    %c0_48 = arith.constant 0 : index
    %83 = vector.load %arg3[%c13, %c0_47, %c0_48] : memref<25x16x120xbf16, #tpu.memory_space<vmem>>, vector<1x16x120xbf16>
    %84 = vector.shape_cast %83 : vector<1x16x120xbf16> to vector<16x120xbf16>
    %cst_49 = arith.constant dense<0.000000e+00> : vector<2x120xf32>
    %85 = tpu.matmul %82, %84, %cst_49 {dimension_numbers = #tpu.dot_dimension_numbers<[1], [0], [0], [1], [0, 0, 1, 1], [], []>} : vector<2x16xbf16>, vector<16x120xbf16>, vector<2x120xf32> -> vector<2x120xf32>
    %86 = arith.addf %81, %85 : vector<2x120xf32>
    %87 = vector.extract_strided_slice %14 {offsets = [28, 0], sizes = [2, 16], strides = [1, 1]} : vector<64x16xbf16> to vector<2x16xbf16>
    %c14 = arith.constant 14 : index
    %c0_50 = arith.constant 0 : index
    %c0_51 = arith.constant 0 : index
    %88 = vector.load %arg3[%c14, %c0_50, %c0_51] : memref<25x16x120xbf16, #tpu.memory_space<vmem>>, vector<1x16x120xbf16>
    %89 = vector.shape_cast %88 : vector<1x16x120xbf16> to vector<16x120xbf16>
    %cst_52 = arith.constant dense<0.000000e+00> : vector<2x120xf32>
    %90 = tpu.matmul %87, %89, %cst_52 {dimension_numbers = #tpu.dot_dimension_numbers<[1], [0], [0], [1], [0, 0, 1, 1], [], []>} : vector<2x16xbf16>, vector<16x120xbf16>, vector<2x120xf32> -> vector<2x120xf32>
    %91 = arith.addf %86, %90 : vector<2x120xf32>
    %92 = vector.extract_strided_slice %14 {offsets = [30, 0], sizes = [2, 16], strides = [1, 1]} : vector<64x16xbf16> to vector<2x16xbf16>
    %c15 = arith.constant 15 : index
    %c0_53 = arith.constant 0 : index
    %c0_54 = arith.constant 0 : index
    %93 = vector.load %arg3[%c15, %c0_53, %c0_54] : memref<25x16x120xbf16, #tpu.memory_space<vmem>>, vector<1x16x120xbf16>
    %94 = vector.shape_cast %93 : vector<1x16x120xbf16> to vector<16x120xbf16>
    %cst_55 = arith.constant dense<0.000000e+00> : vector<2x120xf32>
    %95 = tpu.matmul %92, %94, %cst_55 {dimension_numbers = #tpu.dot_dimension_numbers<[1], [0], [0], [1], [0, 0, 1, 1], [], []>} : vector<2x16xbf16>, vector<16x120xbf16>, vector<2x120xf32> -> vector<2x120xf32>
    %96 = arith.addf %91, %95 : vector<2x120xf32>
    %97 = vector.extract_strided_slice %14 {offsets = [32, 0], sizes = [2, 16], strides = [1, 1]} : vector<64x16xbf16> to vector<2x16xbf16>
    %c16 = arith.constant 16 : index
    %c0_56 = arith.constant 0 : index
    %c0_57 = arith.constant 0 : index
    %98 = vector.load %arg3[%c16, %c0_56, %c0_57] : memref<25x16x120xbf16, #tpu.memory_space<vmem>>, vector<1x16x120xbf16>
    %99 = vector.shape_cast %98 : vector<1x16x120xbf16> to vector<16x120xbf16>
    %cst_58 = arith.constant dense<0.000000e+00> : vector<2x120xf32>
    %100 = tpu.matmul %97, %99, %cst_58 {dimension_numbers = #tpu.dot_dimension_numbers<[1], [0], [0], [1], [0, 0, 1, 1], [], []>} : vector<2x16xbf16>, vector<16x120xbf16>, vector<2x120xf32> -> vector<2x120xf32>
    %101 = arith.addf %96, %100 : vector<2x120xf32>
    %102 = vector.extract_strided_slice %14 {offsets = [34, 0], sizes = [2, 16], strides = [1, 1]} : vector<64x16xbf16> to vector<2x16xbf16>
    %c17 = arith.constant 17 : index
    %c0_59 = arith.constant 0 : index
    %c0_60 = arith.constant 0 : index
    %103 = vector.load %arg3[%c17, %c0_59, %c0_60] : memref<25x16x120xbf16, #tpu.memory_space<vmem>>, vector<1x16x120xbf16>
    %104 = vector.shape_cast %103 : vector<1x16x120xbf16> to vector<16x120xbf16>
    %cst_61 = arith.constant dense<0.000000e+00> : vector<2x120xf32>
    %105 = tpu.matmul %102, %104, %cst_61 {dimension_numbers = #tpu.dot_dimension_numbers<[1], [0], [0], [1], [0, 0, 1, 1], [], []>} : vector<2x16xbf16>, vector<16x120xbf16>, vector<2x120xf32> -> vector<2x120xf32>
    %106 = arith.addf %101, %105 : vector<2x120xf32>
    %107 = vector.extract_strided_slice %14 {offsets = [36, 0], sizes = [2, 16], strides = [1, 1]} : vector<64x16xbf16> to vector<2x16xbf16>
    %c18 = arith.constant 18 : index
    %c0_62 = arith.constant 0 : index
    %c0_63 = arith.constant 0 : index
    %108 = vector.load %arg3[%c18, %c0_62, %c0_63] : memref<25x16x120xbf16, #tpu.memory_space<vmem>>, vector<1x16x120xbf16>
    %109 = vector.shape_cast %108 : vector<1x16x120xbf16> to vector<16x120xbf16>
    %cst_64 = arith.constant dense<0.000000e+00> : vector<2x120xf32>
    %110 = tpu.matmul %107, %109, %cst_64 {dimension_numbers = #tpu.dot_dimension_numbers<[1], [0], [0], [1], [0, 0, 1, 1], [], []>} : vector<2x16xbf16>, vector<16x120xbf16>, vector<2x120xf32> -> vector<2x120xf32>
    %111 = arith.addf %106, %110 : vector<2x120xf32>
    %112 = vector.extract_strided_slice %14 {offsets = [38, 0], sizes = [2, 16], strides = [1, 1]} : vector<64x16xbf16> to vector<2x16xbf16>
    %c19 = arith.constant 19 : index
    %c0_65 = arith.constant 0 : index
    %c0_66 = arith.constant 0 : index
    %113 = vector.load %arg3[%c19, %c0_65, %c0_66] : memref<25x16x120xbf16, #tpu.memory_space<vmem>>, vector<1x16x120xbf16>
    %114 = vector.shape_cast %113 : vector<1x16x120xbf16> to vector<16x120xbf16>
    %cst_67 = arith.constant dense<0.000000e+00> : vector<2x120xf32>
    %115 = tpu.matmul %112, %114, %cst_67 {dimension_numbers = #tpu.dot_dimension_numbers<[1], [0], [0], [1], [0, 0, 1, 1], [], []>} : vector<2x16xbf16>, vector<16x120xbf16>, vector<2x120xf32> -> vector<2x120xf32>
    %116 = arith.addf %111, %115 : vector<2x120xf32>
    %117 = vector.extract_strided_slice %14 {offsets = [40, 0], sizes = [2, 16], strides = [1, 1]} : vector<64x16xbf16> to vector<2x16xbf16>
    %c20 = arith.constant 20 : index
    %c0_68 = arith.constant 0 : index
    %c0_69 = arith.constant 0 : index
    %118 = vector.load %arg3[%c20, %c0_68, %c0_69] : memref<25x16x120xbf16, #tpu.memory_space<vmem>>, vector<1x16x120xbf16>
    %119 = vector.shape_cast %118 : vector<1x16x120xbf16> to vector<16x120xbf16>
    %cst_70 = arith.constant dense<0.000000e+00> : vector<2x120xf32>
    %120 = tpu.matmul %117, %119, %cst_70 {dimension_numbers = #tpu.dot_dimension_numbers<[1], [0], [0], [1], [0, 0, 1, 1], [], []>} : vector<2x16xbf16>, vector<16x120xbf16>, vector<2x120xf32> -> vector<2x120xf32>
    %121 = arith.addf %116, %120 : vector<2x120xf32>
    %122 = vector.extract_strided_slice %14 {offsets = [42, 0], sizes = [2, 16], strides = [1, 1]} : vector<64x16xbf16> to vector<2x16xbf16>
    %c21 = arith.constant 21 : index
    %c0_71 = arith.constant 0 : index
    %c0_72 = arith.constant 0 : index
    %123 = vector.load %arg3[%c21, %c0_71, %c0_72] : memref<25x16x120xbf16, #tpu.memory_space<vmem>>, vector<1x16x120xbf16>
    %124 = vector.shape_cast %123 : vector<1x16x120xbf16> to vector<16x120xbf16>
    %cst_73 = arith.constant dense<0.000000e+00> : vector<2x120xf32>
    %125 = tpu.matmul %122, %124, %cst_73 {dimension_numbers = #tpu.dot_dimension_numbers<[1], [0], [0], [1], [0, 0, 1, 1], [], []>} : vector<2x16xbf16>, vector<16x120xbf16>, vector<2x120xf32> -> vector<2x120xf32>
    %126 = arith.addf %121, %125 : vector<2x120xf32>
    %127 = vector.extract_strided_slice %14 {offsets = [44, 0], sizes = [2, 16], strides = [1, 1]} : vector<64x16xbf16> to vector<2x16xbf16>
    %c22 = arith.constant 22 : index
    %c0_74 = arith.constant 0 : index
    %c0_75 = arith.constant 0 : index
    %128 = vector.load %arg3[%c22, %c0_74, %c0_75] : memref<25x16x120xbf16, #tpu.memory_space<vmem>>, vector<1x16x120xbf16>
    %129 = vector.shape_cast %128 : vector<1x16x120xbf16> to vector<16x120xbf16>
    %cst_76 = arith.constant dense<0.000000e+00> : vector<2x120xf32>
    %130 = tpu.matmul %127, %129, %cst_76 {dimension_numbers = #tpu.dot_dimension_numbers<[1], [0], [0], [1], [0, 0, 1, 1], [], []>} : vector<2x16xbf16>, vector<16x120xbf16>, vector<2x120xf32> -> vector<2x120xf32>
    %131 = arith.addf %126, %130 : vector<2x120xf32>
    %132 = vector.extract_strided_slice %14 {offsets = [46, 0], sizes = [2, 16], strides = [1, 1]} : vector<64x16xbf16> to vector<2x16xbf16>
    %c23 = arith.constant 23 : index
    %c0_77 = arith.constant 0 : index
    %c0_78 = arith.constant 0 : index
    %133 = vector.load %arg3[%c23, %c0_77, %c0_78] : memref<25x16x120xbf16, #tpu.memory_space<vmem>>, vector<1x16x120xbf16>
    %134 = vector.shape_cast %133 : vector<1x16x120xbf16> to vector<16x120xbf16>
    %cst_79 = arith.constant dense<0.000000e+00> : vector<2x120xf32>
    %135 = tpu.matmul %132, %134, %cst_79 {dimension_numbers = #tpu.dot_dimension_numbers<[1], [0], [0], [1], [0, 0, 1, 1], [], []>} : vector<2x16xbf16>, vector<16x120xbf16>, vector<2x120xf32> -> vector<2x120xf32>
    %136 = arith.addf %131, %135 : vector<2x120xf32>
    %137 = vector.extract_strided_slice %14 {offsets = [48, 0], sizes = [2, 16], strides = [1, 1]} : vector<64x16xbf16> to vector<2x16xbf16>
    %c24 = arith.constant 24 : index
    %c0_80 = arith.constant 0 : index
    %c0_81 = arith.constant 0 : index
    %138 = vector.load %arg3[%c24, %c0_80, %c0_81] : memref<25x16x120xbf16, #tpu.memory_space<vmem>>, vector<1x16x120xbf16>
    %139 = vector.shape_cast %138 : vector<1x16x120xbf16> to vector<16x120xbf16>
    %cst_82 = arith.constant dense<0.000000e+00> : vector<2x120xf32>
    %140 = tpu.matmul %137, %139, %cst_82 {dimension_numbers = #tpu.dot_dimension_numbers<[1], [0], [0], [1], [0, 0, 1, 1], [], []>} : vector<2x16xbf16>, vector<16x120xbf16>, vector<2x120xf32> -> vector<2x120xf32>
    %141 = arith.addf %136, %140 : vector<2x120xf32>
    %142 = math.tanh %141 : vector<2x120xf32>
    %143 = arith.truncf %142 : vector<2x120xf32> to vector<2x120xbf16>
    %c0_83 = arith.constant 0 : index
    %c0_84 = arith.constant 0 : index
    %144 = vector.load %arg5[%c0_83, %c0_84] : memref<120x84xbf16, #tpu.memory_space<vmem>>, vector<120x84xbf16>
    %cst_85 = arith.constant dense<0.000000e+00> : vector<2x84xf32>
    %145 = tpu.matmul %143, %144, %cst_85 {dimension_numbers = #tpu.dot_dimension_numbers<[1], [0], [0], [1], [0, 0, 1, 1], [], []>} : vector<2x120xbf16>, vector<120x84xbf16>, vector<2x84xf32> -> vector<2x84xf32>
    %c0_86 = arith.constant 0 : index
    %c0_87 = arith.constant 0 : index
    %146 = vector.load %arg6[%c0_86, %c0_87] : memref<1x84xf32, #tpu.memory_space<vmem>>, vector<1x84xf32>
    %147 = vector.broadcast %146 : vector<1x84xf32> to vector<2x84xf32>
    %148 = arith.addf %145, %147 : vector<2x84xf32>
    %149 = math.tanh %148 : vector<2x84xf32>
    %150 = arith.truncf %149 : vector<2x84xf32> to vector<2x84xbf16>
    %c0_88 = arith.constant 0 : index
    %c0_89 = arith.constant 0 : index
    %151 = vector.load %arg7[%c0_88, %c0_89] : memref<84x10xbf16, #tpu.memory_space<vmem>>, vector<84x10xbf16>
    %cst_90 = arith.constant dense<0.000000e+00> : vector<2x10xf32>
    %152 = tpu.matmul %150, %151, %cst_90 {dimension_numbers = #tpu.dot_dimension_numbers<[1], [0], [0], [1], [0, 0, 1, 1], [], []>} : vector<2x84xbf16>, vector<84x10xbf16>, vector<2x10xf32> -> vector<2x10xf32>
    %c0_91 = arith.constant 0 : index
    %c0_92 = arith.constant 0 : index
    %153 = vector.load %arg8[%c0_91, %c0_92] : memref<1x10xf32, #tpu.memory_space<vmem>>, vector<1x10xf32>
    %154 = vector.broadcast %153 : vector<1x10xf32> to vector<2x10xf32>
    %155 = arith.addf %152, %154 : vector<2x10xf32>
    %c0_93 = arith.constant 0 : index
    %c0_94 = arith.constant 0 : index
    %156 = vector.load %arg9[%c0_93, %c0_94] : memref<2x10xf32, #tpu.memory_space<vmem>>, vector<2x10xf32>
    tpu.vector_store %arg9[%c0_93, %c0_94], %155 {strides = array<i32>} : memref<2x10xf32, #tpu.memory_space<vmem>>, vector<2x10xf32>,
    return
  }
}

</mosaic_0001>

<llo_original>
// kernel: lenet5_forward.2
$region0: #{lenet5_forward.2}
  #allocation0 [shape = 'u32[]', space=smem, size = 0x4, offset = 0x4, fixed_abs, tag = 'smem constant byte address 0x4 - core index']
  #allocation1 [shape = 'u32[144,128]{1,0:T(1,128)}', space=vmem, size = 0x12000, scoped, tag = 'internal scratch']
  %s0 = inlined_call_operand.vmem [shape: bf16[6,25], index: 0, kind: input, shape index: {}]
  %s1 = inlined_call_operand.vmem [shape: f32[6,1], index: 1, kind: input, shape index: {}]
  %s2 = inlined_call_operand.vmem [shape: bf16[25,2048], index: 2, kind: input, shape index: {}]
  %s3 = inlined_call_operand.vmem [shape: bf16[6,512], index: 3, kind: output, shape index: {}]
  %s4 = sld [smem:[#allocation0]]
  $region22: #{lenet5_forward.2} parent=0
    _
  %s6 = ssub.s32 1, %s4
  %s7 = scalar_select 0, %s6, %s4
  // Predicated region
  $region2: #{lenet5_forward.2} parent=0 // pred_check
    _
  $region3: #{lenet5_forward.2} parent=0 // pred_check_branch
    %9 = sbr.rel (0) target = $region5
  $region4: #{lenet5_forward.2} parent=0 // pred_region
    _
  $region5: #{lenet5_forward.2} parent=0 // pred_fallthru
    _
  // Predicated region
  $region6: #{lenet5_forward.2} parent=0 // pred_check
    _
  $region7: #{lenet5_forward.2} parent=0 // pred_check_branch
    %11 = sbr.rel (0) target = $region9
  $region8: #{lenet5_forward.2} parent=0 // pred_region
    _
  $region9: #{lenet5_forward.2} parent=0 // pred_fallthru
    _
  // Predicated region
  $region10: #{lenet5_forward.2} parent=0 // pred_check
    _
  $region11: #{lenet5_forward.2} parent=0 // pred_check_branch
    %13 = sbr.rel (0) target = $region13
  $region12: #{lenet5_forward.2} parent=0 // pred_region
    _
  $region13: #{lenet5_forward.2} parent=0 // pred_fallthru
    _
  %v15 = vld [vmem:[%s0] sm:$0x7]
  %v16 = vld [vmem:[%s2] sm:$0xff]
  %v17 = vld [vmem:[%s2 + $0x8] sm:$0xff]
  %v18 = vld [vmem:[%s2 + $0x10] sm:$0xff]
  %v19 = vld [vmem:[%s2 + $0x18] sm:$0xff]
  %v20 = vld [vmem:[%s2 + $0x20] sm:$0xff]
  %v21 = vld [vmem:[%s2 + $0x28] sm:$0xff]
  %v22 = vld [vmem:[%s2 + $0x30] sm:$0xff]
  %v23 = vld [vmem:[%s2 + $0x38] sm:$0xff]
  %v24 = vld [vmem:[%s2 + $0x40] sm:$0xff]
  %v25 = vld [vmem:[%s2 + $0x48] sm:$0xff]
  %v26 = vld [vmem:[%s2 + $0x50] sm:$0xff]
  %v27 = vld [vmem:[%s2 + $0x58] sm:$0xff]
  %v28 = vld [vmem:[%s2 + $0x60] sm:$0xff]
  %v29 = vld [vmem:[%s2 + $0x68] sm:$0xff]
  %v30 = vld [vmem:[%s2 + $0x70] sm:$0xff]
  %v31 = vld [vmem:[%s2 + $0x78] sm:$0xff]
  %v32 = vld [vmem:[%s2 + $0x80] sm:$0xff]
  %v33 = vld [vmem:[%s2 + $0x88] sm:$0xff]
  %v34 = vld [vmem:[%s2 + $0x90] sm:$0xff]
  %v35 = vld [vmem:[%s2 + $0x98] sm:$0xff]
  %v36 = vld [vmem:[%s2 + $0xa0] sm:$0xff]
  %v37 = vld [vmem:[%s2 + $0xa8] sm:$0xff]
  %v38 = vld [vmem:[%s2 + $0xb0] sm:$0xff]
  %v39 = vld [vmem:[%s2 + $0xb8] sm:$0xff]
  %v40 = vld [vmem:[%s2 + $0xc0] sm:$0x11]
  %v41 = vld [vmem:[%s2 + $0xc8] sm:$0x11]
  %v42 = vld [vmem:[%s2 + $0xd0] sm:$0x11]
  %v43 = vld [vmem:[%s2 + $0xd8] sm:$0x11]
  %v44 = vld [vmem:[%s2 + $0xe0] sm:$0x11]
  %v45 = vld [vmem:[%s2 + $0xe8] sm:$0x11]
  %v46 = vld [vmem:[%s2 + $0xf0] sm:$0x11]
  %v47 = vld [vmem:[%s2 + $0xf8] sm:$0x11]
  %v80 = vunpack.c.l.b16 %v16
  %v81 = vunpack.c.h.b16 %v16
  %v82 = vunpack.c.l.b16 %v17
  %v83 = vunpack.c.h.b16 %v17
  %v84 = vunpack.c.l.b16 %v18
  %v85 = vunpack.c.h.b16 %v18
  %v86 = vunpack.c.l.b16 %v19
  %v87 = vunpack.c.h.b16 %v19
  %v88 = vunpack.c.l.b16 %v20
  %v89 = vunpack.c.h.b16 %v20
  %v90 = vunpack.c.l.b16 %v21
  %v91 = vunpack.c.h.b16 %v21
  %v92 = vunpack.c.l.b16 %v22
  %v93 = vunpack.c.h.b16 %v22
  %v94 = vunpack.c.l.b16 %v23
  %v95 = vunpack.c.h.b16 %v23
  %v96 = vunpack.c.l.b16 %v24
  %v97 = vunpack.c.h.b16 %v24
  %v98 = vunpack.c.l.b16 %v25
  %v99 = vunpack.c.h.b16 %v25
  %v100 = vunpack.c.l.b16 %v26
  %v101 = vunpack.c.h.b16 %v26
  %v102 = vunpack.c.l.b16 %v27
  %v103 = vunpack.c.h.b16 %v27
  %v104 = vunpack.c.l.b16 %v28
  %v105 = vunpack.c.h.b16 %v28
  %v106 = vunpack.c.l.b16 %v29
  %v107 = vunpack.c.h.b16 %v29
  %v108 = vunpack.c.l.b16 %v30
  %v109 = vunpack.c.h.b16 %v30
  %v110 = vunpack.c.l.b16 %v31
  %v111 = vunpack.c.h.b16 %v31
  %v112 = vunpack.c.l.b16 %v32
  %v113 = vunpack.c.h.b16 %v32
  %v114 = vunpack.c.l.b16 %v33
  %v115 = vunpack.c.h.b16 %v33
  %v116 = vunpack.c.l.b16 %v34
  %v117 = vunpack.c.h.b16 %v34
  %v118 = vunpack.c.l.b16 %v35
  %v119 = vunpack.c.h.b16 %v35
  %v120 = vunpack.c.l.b16 %v36
  %v121 = vunpack.c.h.b16 %v36
  %v122 = vunpack.c.l.b16 %v37
  %v123 = vunpack.c.h.b16 %v37
  %v124 = vunpack.c.l.b16 %v38
  %v125 = vunpack.c.h.b16 %v38
  %v126 = vunpack.c.l.b16 %v39
  %v127 = vunpack.c.h.b16 %v39
  %v128 = vunpack.c.l.b16 %v40
  %v129 = vunpack.c.h.b16 %v40
  %v130 = vunpack.c.l.b16 %v41
  %v131 = vunpack.c.h.b16 %v41
  %v132 = vunpack.c.l.b16 %v42
  %v133 = vunpack.c.h.b16 %v42
  %v134 = vunpack.c.l.b16 %v43
  %v135 = vunpack.c.h.b16 %v43
  %v136 = vunpack.c.l.b16 %v44
  %v137 = vunpack.c.h.b16 %v44
  %v138 = vunpack.c.l.b16 %v45
  %v139 = vunpack.c.h.b16 %v45
  %v140 = vunpack.c.l.b16 %v46
  %v141 = vunpack.c.h.b16 %v46
  %v142 = vunpack.c.l.b16 %v47
  %v143 = vunpack.c.h.b16 %v47
  %v144 = vpack.c.b16 %v96, %v80
  %v145 = vpack.c.b16 %v97, %v81
  %v146 = vpack.c.b16 %v98, %v82
  %v147 = vpack.c.b16 %v99, %v83
  %v148 = vpack.c.b16 %v100, %v84
  %v149 = vpack.c.b16 %v101, %v85
  %v150 = vpack.c.b16 %v102, %v86
  %v151 = vpack.c.b16 %v103, %v87
  %v152 = vpack.c.b16 %v104, %v88
  %v153 = vpack.c.b16 %v105, %v89
  %v154 = vpack.c.b16 %v106, %v90
  %v155 = vpack.c.b16 %v107, %v91
  %v156 = vpack.c.b16 %v108, %v92
  %v157 = vpack.c.b16 %v109, %v93
  %v158 = vpack.c.b16 %v110, %v94
  %v159 = vpack.c.b16 %v111, %v95
  %v160 = vpack.c.b16 %v128, %v112
  %v161 = vpack.c.b16 %v129, %v113
  %v162 = vpack.c.b16 %v130, %v114
  %v163 = vpack.c.b16 %v131, %v115
  %v164 = vpack.c.b16 %v132, %v116
  %v165 = vpack.c.b16 %v133, %v117
  %v166 = vpack.c.b16 %v134, %v118
  %v167 = vpack.c.b16 %v135, %v119
  %v168 = vpack.c.b16 %v136, %v120
  %v169 = vpack.c.b16 %v137, %v121
  %v170 = vpack.c.b16 %v138, %v122
  %v171 = vpack.c.b16 %v139, %v123
  %v172 = vpack.c.b16 %v140, %v124
  %v173 = vpack.c.b16 %v141, %v125
  %v174 = vpack.c.b16 %v142, %v126
  %v175 = vpack.c.b16 %v143, %v127
  %vm192 = vcmask 203776
  %v194 = vsel %vm192, %v15, 0
  %vm196 = vcmask 1043456
  %vm197 = vcmask 1044480
  %v198 = vsel %vm196, 4294967295, 65535
  %v199 = vsel %vm197, %v198, 0
  %v201 = vand.u32 %v160, %v199
  %v204 = vand.u32 %v161, %v199
  %v207 = vand.u32 %v162, %v199
  %v210 = vand.u32 %v163, %v199
  %v213 = vand.u32 %v164, %v199
  %v216 = vand.u32 %v165, %v199
  %v219 = vand.u32 %v166, %v199
  %v222 = vand.u32 %v167, %v199
  %v225 = vand.u32 %v168, %v199
  %v228 = vand.u32 %v169, %v199
  %v231 = vand.u32 %v170, %v199
  %v234 = vand.u32 %v171, %v199
  %v237 = vand.u32 %v172, %v199
  %v240 = vand.u32 %v173, %v199
  %v243 = vand.u32 %v174, %v199
  %v246 = vand.u32 %v175, %v199
  %248 = vmatprep.subr.bf16.mxu0 %v145
  %249 = vmatpush1.bf16.msra.mxu0 %v144
  %250 = vmatprep.subr.bf16.mxu0 %v204
  %251 = vmatpush1.bf16.msra.mxu0 %v201
  %252 = vmatprep.subr.bf16.mxu0 0
  %253 = vmatpush1.bf16.msra.mxu0 0
  %254 = vmatprep.subr.bf16.mxu0 0
  %255 = vmatpush1.bf16.msra.mxu0 0
  %256 = vmatprep.subr.bf16.mxu0 0
  %257 = vmatpush1.bf16.msra.mxu0 0
  %258 = vmatprep.subr.bf16.mxu0 0
  %259 = vmatpush1.bf16.msra.mxu0 0
  %260 = vmatprep.subr.bf16.mxu0 0
  %261 = vmatpush1.bf16.msra.mxu0 0
  %262 = vmatprep.subr.bf16.mxu0 0
  %263 = vmatpush1.bf16.msra.mxu0 0
  %264 = vmatprep.subr.bf16.mxu0 0
  %265 = vmatpush1.bf16.msra.mxu0 0
  %266 = vmatprep.subr.bf16.mxu0 0
  %267 = vmatpush1.bf16.msra.mxu0 0
  %268 = vmatprep.subr.bf16.mxu0 0
  %269 = vmatpush1.bf16.msra.mxu0 0
  %270 = vmatprep.subr.bf16.mxu0 0
  %271 = vmatpush1.bf16.msra.mxu0 0
  %272 = vmatprep.subr.bf16.mxu0 0
  %273 = vmatpush1.bf16.msra.mxu0 0
  %274 = vmatprep.subr.bf16.mxu0 0
  %275 = vmatpush1.bf16.msra.mxu0 0
  %276 = vmatprep.subr.bf16.mxu0 0
  %277 = vmatpush1.bf16.msra.mxu0 0
  %278 = vmatprep.subr.bf16.mxu0 0
  %279 = vmatpush1.bf16.msra.mxu0 0
  %280 = vmatprep.mubr.bf16.mxu0 0
  %281 = vmatmul.mubr.bf16.gmra.mrb[0].mxu0 %v194
  %v282 = vpop.f32.mrb[0].mxu0
  %v283 = vadd.f32 0.0, %v282
  %v284 = vpop.f32.mrb[0].mxu0
  %v285 = vadd.f32 0.0, %v284
  %v286 = vpop.f32.mrb[0].mxu0
  %v287 = vpop.f32.mrb[0].mxu0
  %288 = vdwg.mxu0
  %289 = vmatprep.subr.bf16.mxu0 %v147
  %290 = vmatpush1.bf16.msra.mxu0 %v146
  %291 = vmatprep.subr.bf16.mxu0 %v210
  %292 = vmatpush1.bf16.msra.mxu0 %v207
  %293 = vmatprep.subr.bf16.mxu0 0
  %294 = vmatpush1.bf16.msra.mxu0 0
  %295 = vmatprep.subr.bf16.mxu0 0
  %296 = vmatpush1.bf16.msra.mxu0 0
  %297 = vmatprep.subr.bf16.mxu0 0
  %298 = vmatpush1.bf16.msra.mxu0 0
  %299 = vmatprep.subr.bf16.mxu0 0
  %300 = vmatpush1.bf16.msra.mxu0 0
  %301 = vmatprep.subr.bf16.mxu0 0
  %302 = vmatpush1.bf16.msra.mxu0 0
  %303 = vmatprep.subr.bf16.mxu0 0
  %304 = vmatpush1.bf16.msra.mxu0 0
  %305 = vmatprep.subr.bf16.mxu0 0
  %306 = vmatpush1.bf16.msra.mxu0 0
  %307 = vmatprep.subr.bf16.mxu0 0
  %308 = vmatpush1.bf16.msra.mxu0 0
  %309 = vmatprep.subr.bf16.mxu0 0
  %310 = vmatpush1.bf16.msra.mxu0 0
  %311 = vmatprep.subr.bf16.mxu0 0
  %312 = vmatpush1.bf16.msra.mxu0 0
  %313 = vmatprep.subr.bf16.mxu0 0
  %314 = vmatpush1.bf16.msra.mxu0 0
  %315 = vmatprep.subr.bf16.mxu0 0
  %316 = vmatpush1.bf16.msra.mxu0 0
  %317 = vmatprep.subr.bf16.mxu0 0
  %318 = vmatpush1.bf16.msra.mxu0 0
  %319 = vmatprep.subr.bf16.mxu0 0
  %320 = vmatpush1.bf16.msra.mxu0 0
  %321 = vmatprep.mubr.bf16.mxu0 0
  %322 = vmatmul.mubr.bf16.gmra.mrb[0].mxu0 %v194
  %v323 = vpop.f32.mrb[0].mxu0
  %v324 = vadd.f32 0.0, %v323
  %v325 = vpop.f32.mrb[0].mxu0
  %v326 = vadd.f32 0.0, %v325
  %v327 = vpop.f32.mrb[0].mxu0
  %v328 = vpop.f32.mrb[0].mxu0
  %329 = vdwg.mxu0
  %330 = vmatprep.subr.bf16.mxu0 %v149
  %331 = vmatpush1.bf16.msra.mxu0 %v148
  %332 = vmatprep.subr.bf16.mxu0 %v216
  %333 = vmatpush1.bf16.msra.mxu0 %v213
  %334 = vmatprep.subr.bf16.mxu0 0
  %335 = vmatpush1.bf16.msra.mxu0 0
  %336 = vmatprep.subr.bf16.mxu0 0
  %337 = vmatpush1.bf16.msra.mxu0 0
  %338 = vmatprep.subr.bf16.mxu0 0
  %339 = vmatpush1.bf16.msra.mxu0 0
  %340 = vmatprep.subr.bf16.mxu0 0
  %341 = vmatpush1.bf16.msra.mxu0 0
  %342 = vmatprep.subr.bf16.mxu0 0
  %343 = vmatpush1.bf16.msra.mxu0 0
  %344 = vmatprep.subr.bf16.mxu0 0
  %345 = vmatpush1.bf16.msra.mxu0 0
  %346 = vmatprep.subr.bf16.mxu0 0
  %347 = vmatpush1.bf16.msra.mxu0 0
  %348 = vmatprep.subr.bf16.mxu0 0
  %349 = vmatpush1.bf16.msra.mxu0 0
  %350 = vmatprep.subr.bf16.mxu0 0
  %351 = vmatpush1.bf16.msra.mxu0 0
  %352 = vmatprep.subr.bf16.mxu0 0
  %353 = vmatpush1.bf16.msra.mxu0 0
  %354 = vmatprep.subr.bf16.mxu0 0
  %355 = vmatpush1.bf16.msra.mxu0 0
  %356 = vmatprep.subr.bf16.mxu0 0
  %357 = vmatpush1.bf16.msra.mxu0 0
  %358 = vmatprep.subr.bf16.mxu0 0
  %359 = vmatpush1.bf16.msra.mxu0 0
  %360 = vmatprep.subr.bf16.mxu0 0
  %361 = vmatpush1.bf16.msra.mxu0 0
  %362 = vmatprep.mubr.bf16.mxu0 0
  %363 = vmatmul.mubr.bf16.gmra.mrb[0].mxu0 %v194
  %v364 = vpop.f32.mrb[0].mxu0
  %v365 = vadd.f32 0.0, %v364
  %v366 = vpop.f32.mrb[0].mxu0
  %v367 = vadd.f32 0.0, %v366
  %v368 = vpop.f32.mrb[0].mxu0
  %v369 = vpop.f32.mrb[0].mxu0
  %370 = vdwg.mxu0
  %371 = vmatprep.subr.bf16.mxu0 %v151
  %372 = vmatpush1.bf16.msra.mxu0 %v150
  %373 = vmatprep.subr.bf16.mxu0 %v222
  %374 = vmatpush1.bf16.msra.mxu0 %v219
  %375 = vmatprep.subr.bf16.mxu0 0
  %376 = vmatpush1.bf16.msra.mxu0 0
  %377 = vmatprep.subr.bf16.mxu0 0
  %378 = vmatpush1.bf16.msra.mxu0 0
  %379 = vmatprep.subr.bf16.mxu0 0
  %380 = vmatpush1.bf16.msra.mxu0 0
  %381 = vmatprep.subr.bf16.mxu0 0
  %382 = vmatpush1.bf16.msra.mxu0 0
  %383 = vmatprep.subr.bf16.mxu0 0
  %384 = vmatpush1.bf16.msra.mxu0 0
  %385 = vmatprep.subr.bf16.mxu0 0
  %386 = vmatpush1.bf16.msra.mxu0 0
  %387 = vmatprep.subr.bf16.mxu0 0
  %388 = vmatpush1.bf16.msra.mxu0 0
  %389 = vmatprep.subr.bf16.mxu0 0
  %390 = vmatpush1.bf16.msra.mxu0 0
  %391 = vmatprep.subr.bf16.mxu0 0
  %392 = vmatpush1.bf16.msra.mxu0 0
  %393 = vmatprep.subr.bf16.mxu0 0
  %394 = vmatpush1.bf16.msra.mxu0 0
  %395 = vmatprep.subr.bf16.mxu0 0
  %396 = vmatpush1.bf16.msra.mxu0 0
  %397 = vmatprep.subr.bf16.mxu0 0
  %398 = vmatpush1.bf16.msra.mxu0 0
  %399 = vmatprep.subr.bf16.mxu0 0
  %400 = vmatpush1.bf16.msra.mxu0 0
  %401 = vmatprep.subr.bf16.mxu0 0
  %402 = vmatpush1.bf16.msra.mxu0 0
  %403 = vmatprep.mubr.bf16.mxu0 0
  %404 = vmatmul.mubr.bf16.gmra.mrb[0].mxu0 %v194
  %v405 = vpop.f32.mrb[0].mxu0
  %v406 = vadd.f32 0.0, %v405
  %v407 = vpop.f32.mrb[0].mxu0
  %v408 = vadd.f32 0.0, %v407
  %v409 = vpop.f32.mrb[0].mxu0
  %v410 = vpop.f32.mrb[0].mxu0
  %411 = vdwg.mxu0
  %412 = vmatprep.subr.bf16.mxu0 %v153
  %413 = vmatpush1.bf16.msra.mxu0 %v152
  %414 = vmatprep.subr.bf16.mxu0 %v228
  %415 = vmatpush1.bf16.msra.mxu0 %v225
  %416 = vmatprep.subr.bf16.mxu0 0
  %417 = vmatpush1.bf16.msra.mxu0 0
  %418 = vmatprep.subr.bf16.mxu0 0
  %419 = vmatpush1.bf16.msra.mxu0 0
  %420 = vmatprep.subr.bf16.mxu0 0
  %421 = vmatpush1.bf16.msra.mxu0 0
  %422 = vmatprep.subr.bf16.mxu0 0
  %423 = vmatpush1.bf16.msra.mxu0 0
  %424 = vmatprep.subr.bf16.mxu0 0
  %425 = vmatpush1.bf16.msra.mxu0 0
  %426 = vmatprep.subr.bf16.mxu0 0
  %427 = vmatpush1.bf16.msra.mxu0 0
  %428 = vmatprep.subr.bf16.mxu0 0
  %429 = vmatpush1.bf16.msra.mxu0 0
  %430 = vmatprep.subr.bf16.mxu0 0
  %431 = vmatpush1.bf16.msra.mxu0 0
  %432 = vmatprep.subr.bf16.mxu0 0
  %433 = vmatpush1.bf16.msra.mxu0 0
  %434 = vmatprep.subr.bf16.mxu0 0
  %435 = vmatpush1.bf16.msra.mxu0 0
  %436 = vmatprep.subr.bf16.mxu0 0
  %437 = vmatpush1.bf16.msra.mxu0 0
  %438 = vmatprep.subr.bf16.mxu0 0
  %439 = vmatpush1.bf16.msra.mxu0 0
  %440 = vmatprep.subr.bf16.mxu0 0
  %441 = vmatpush1.bf16.msra.mxu0 0
  %442 = vmatprep.subr.bf16.mxu0 0
  %443 = vmatpush1.bf16.msra.mxu0 0
  %444 = vmatprep.mubr.bf16.mxu0 0
  %445 = vmatmul.mubr.bf16.gmra.mrb[0].mxu0 %v194
  %v446 = vpop.f32.mrb[0].mxu0
  %v447 = vadd.f32 0.0, %v446
  %v448 = vpop.f32.mrb[0].mxu0
  %v449 = vadd.f32 0.0, %v448
  %v450 = vpop.f32.mrb[0].mxu0
  %v451 = vpop.f32.mrb[0].mxu0
  %452 = vdwg.mxu0
  %453 = vmatprep.subr.bf16.mxu0 %v155
  %454 = vmatpush1.bf16.msra.mxu0 %v154
  %455 = vmatprep.subr.bf16.mxu0 %v234
  %456 = vmatpush1.bf16.msra.mxu0 %v231
  %457 = vmatprep.subr.bf16.mxu0 0
  %458 = vmatpush1.bf16.msra.mxu0 0
  %459 = vmatprep.subr.bf16.mxu0 0
  %460 = vmatpush1.bf16.msra.mxu0 0
  %461 = vmatprep.subr.bf16.mxu0 0
  %462 = vmatpush1.bf16.msra.mxu0 0
  %463 = vmatprep.subr.bf16.mxu0 0
  %464 = vmatpush1.bf16.msra.mxu0 0
  %465 = vmatprep.subr.bf16.mxu0 0
  %466 = vmatpush1.bf16.msra.mxu0 0
  %467 = vmatprep.subr.bf16.mxu0 0
  %468 = vmatpush1.bf16.msra.mxu0 0
  %469 = vmatprep.subr.bf16.mxu0 0
  %470 = vmatpush1.bf16.msra.mxu0 0
  %471 = vmatprep.subr.bf16.mxu0 0
  %472 = vmatpush1.bf16.msra.mxu0 0
  %473 = vmatprep.subr.bf16.mxu0 0
  %474 = vmatpush1.bf16.msra.mxu0 0
  %475 = vmatprep.subr.bf16.mxu0 0
  %476 = vmatpush1.bf16.msra.mxu0 0
  %477 = vmatprep.subr.bf16.mxu0 0
  %478 = vmatpush1.bf16.msra.mxu0 0
  %479 = vmatprep.subr.bf16.mxu0 0
  %480 = vmatpush1.bf16.msra.mxu0 0
  %481 = vmatprep.subr.bf16.mxu0 0
  %482 = vmatpush1.bf16.msra.mxu0 0
  %483 = vmatprep.subr.bf16.mxu0 0
  %484 = vmatpush1.bf16.msra.mxu0 0
  %485 = vmatprep.mubr.bf16.mxu0 0
  %486 = vmatmul.mubr.bf16.gmra.mrb[0].mxu0 %v194
  %v487 = vpop.f32.mrb[0].mxu0
  %v488 = vadd.f32 0.0, %v487
  %v489 = vpop.f32.mrb[0].mxu0
  %v490 = vadd.f32 0.0, %v489
  %v491 = vpop.f32.mrb[0].mxu0
  %v492 = vpop.f32.mrb[0].mxu0
  %493 = vdwg.mxu0
  %494 = vmatprep.subr.bf16.mxu0 %v157
  %495 = vmatpush1.bf16.msra.mxu0 %v156
  %496 = vmatprep.subr.bf16.mxu0 %v240
  %497 = vmatpush1.bf16.msra.mxu0 %v237
  %498 = vmatprep.subr.bf16.mxu0 0
  %499 = vmatpush1.bf16.msra.mxu0 0
  %500 = vmatprep.subr.bf16.mxu0 0
  %501 = vmatpush1.bf16.msra.mxu0 0
  %502 = vmatprep.subr.bf16.mxu0 0
  %503 = vmatpush1.bf16.msra.mxu0 0
  %504 = vmatprep.subr.bf16.mxu0 0
  %505 = vmatpush1.bf16.msra.mxu0 0
  %506 = vmatprep.subr.bf16.mxu0 0
  %507 = vmatpush1.bf16.msra.mxu0 0
  %508 = vmatprep.subr.bf16.mxu0 0
  %509 = vmatpush1.bf16.msra.mxu0 0
  %510 = vmatprep.subr.bf16.mxu0 0
  %511 = vmatpush1.bf16.msra.mxu0 0
  %512 = vmatprep.subr.bf16.mxu0 0
  %513 = vmatpush1.bf16.msra.mxu0 0
  %514 = vmatprep.subr.bf16.mxu0 0
  %515 = vmatpush1.bf16.msra.mxu0 0
  %516 = vmatprep.subr.bf16.mxu0 0
  %517 = vmatpush1.bf16.msra.mxu0 0
  %518 = vmatprep.subr.bf16.mxu0 0
  %519 = vmatpush1.bf16.msra.mxu0 0
  %520 = vmatprep.subr.bf16.mxu0 0
  %521 = vmatpush1.bf16.msra.mxu0 0
  %522 = vmatprep.subr.bf16.mxu0 0
  %523 = vmatpush1.bf16.msra.mxu0 0
  %524 = vmatprep.subr.bf16.mxu0 0
  %525 = vmatpush1.bf16.msra.mxu0 0
  %526 = vmatprep.mubr.bf16.mxu0 0
  %527 = vmatmul.mubr.bf16.gmra.mrb[0].mxu0 %v194
  %v528 = vpop.f32.mrb[0].mxu0
  %v529 = vadd.f32 0.0, %v528
  %v530 = vpop.f32.mrb[0].mxu0
  %v531 = vadd.f32 0.0, %v530
  %v532 = vpop.f32.mrb[0].mxu0
  %v533 = vpop.f32.mrb[0].mxu0
  %534 = vdwg.mxu0
  %535 = vmatprep.subr.bf16.mxu0 %v159
  %536 = vmatpush1.bf16.msra.mxu0 %v158
  %537 = vmatprep.subr.bf16.mxu0 %v246
  %538 = vmatpush1.bf16.msra.mxu0 %v243
  %539 = vmatprep.subr.bf16.mxu0 0
  %540 = vmatpush1.bf16.msra.mxu0 0
  %541 = vmatprep.subr.bf16.mxu0 0
  %542 = vmatpush1.bf16.msra.mxu0 0
  %543 = vmatprep.subr.bf16.mxu0 0
  %544 = vmatpush1.bf16.msra.mxu0 0
  %545 = vmatprep.subr.bf16.mxu0 0
  %546 = vmatpush1.bf16.msra.mxu0 0
  %547 = vmatprep.subr.bf16.mxu0 0
  %548 = vmatpush1.bf16.msra.mxu0 0
  %549 = vmatprep.subr.bf16.mxu0 0
  %550 = vmatpush1.bf16.msra.mxu0 0
  %551 = vmatprep.subr.bf16.mxu0 0
  %552 = vmatpush1.bf16.msra.mxu0 0
  %553 = vmatprep.subr.bf16.mxu0 0
  %554 = vmatpush1.bf16.msra.mxu0 0
  %555 = vmatprep.subr.bf16.mxu0 0
  %556 = vmatpush1.bf16.msra.mxu0 0
  %557 = vmatprep.subr.bf16.mxu0 0
  %558 = vmatpush1.bf16.msra.mxu0 0
  %559 = vmatprep.subr.bf16.mxu0 0
  %560 = vmatpush1.bf16.msra.mxu0 0
  %561 = vmatprep.subr.bf16.mxu0 0
  %562 = vmatpush1.bf16.msra.mxu0 0
  %563 = vmatprep.subr.bf16.mxu0 0
  %564 = vmatpush1.bf16.msra.mxu0 0
  %565 = vmatprep.subr.bf16.mxu0 0
  %566 = vmatpush1.bf16.msra.mxu0 0
  %567 = vmatprep.mubr.bf16.mxu0 0
  %568 = vmatmul.mubr.bf16.gmra.mrb[0].mxu0 %v194
  %v569 = vpop.f32.mrb[0].mxu0
  %v570 = vadd.f32 0.0, %v569
  %v571 = vpop.f32.mrb[0].mxu0
  %v572 = vadd.f32 0.0, %v571
  %v573 = vpop.f32.mrb[0].mxu0
  %v574 = vpop.f32.mrb[0].mxu0
  %575 = vdwg.mxu0
  %v576 = vmax.f32 %v283, %v365
  %v577 = vmax.f32 %v285, %v367
  %v578 = vmax.f32 %v324, %v406
  %v579 = vmax.f32 %v326, %v408
  %v580 = vmax.f32 %v447, %v529
  %v581 = vmax.f32 %v449, %v531
  %v582 = vmax.f32 %v488, %v570
  %v583 = vmax.f32 %v490, %v572
  %v584 = vmax.f32 %v576, %v580
  %v585 = vmax.f32 %v577, %v581
  %v586 = vmax.f32 %v578, %v582
  %v587 = vmax.f32 %v579, %v583
  %v588 = vld [vmem:[%s1] sm:$0x3f]
  %590 = vset.pattern.permute.xlu0 0
  %591 = vperm.xlu0 %590, %v588
  %v592 = vpop.permute.xlu0 %591
  %v594 = vadd.f32 %v584, %v592
  %v595 = vadd.f32 %v585, %v592
  %v596 = vadd.f32 %v586, %v592
  %v597 = vadd.f32 %v587, %v592
  %v598 = vtanh.pop %v594
  %v599 = vtanh.pop %v595
  %v600 = vtanh.pop %v596
  %v601 = vtanh.pop %v597
  %v602 = vpack.c.bf16 %v598, %v598
  %v603 = vpack.c.bf16 %v599, %v599
  %v604 = vpack.c.bf16 %v600, %v600
  %v605 = vpack.c.bf16 %v601, %v601
  %v610 = vunpack.c.l.b16 %v602
  %v611 = vunpack.c.l.b16 %v603
  %v612 = vunpack.c.l.b16 %v604
  %v613 = vunpack.c.l.b16 %v605
  %v614 = vpack.c.b16 %v611, %v610
  %v615 = vpack.c.b16 %v613, %v612
  %618 = vst [vmem:[%s3] sm:$0x77] %v614
  %619 = vst [vmem:[%s3 + $0x8] sm:$0x77] %v615
  // Predicated region
  $region14: #{lenet5_forward.2} parent=0 // pred_check
    _
  $region15: #{lenet5_forward.2} parent=0 // pred_check_branch
    %621 = sbr.rel (0) target = $region17
  $region16: #{lenet5_forward.2} parent=0 // pred_region
    _
  $region17: #{lenet5_forward.2} parent=0 // pred_fallthru
    _
  // Predicated region
  $region18: #{lenet5_forward.2} parent=0 // pred_check
    _
  $region19: #{lenet5_forward.2} parent=0 // pred_check_branch
    %623 = sbr.rel (0) target = $region21
  $region20: #{lenet5_forward.2} parent=0 // pred_region
    _
  $region21: #{lenet5_forward.2} parent=0 // pred_fallthru
    _

// kernel: lenet5_forward.3
$region0: #{lenet5_forward.3}
  #allocation0 [shape = 'u32[]', space=smem, size = 0x4, offset = 0x4, fixed_abs, tag = 'smem constant byte address 0x4 - core index']
  #allocation1 [shape = 'u32[144,128]{1,0:T(1,128)}', space=vmem, size = 0x12000, scoped, tag = 'internal scratch']
  %s0 = inlined_call_operand.vmem [shape: bf16[256,150], index: 0, kind: input, shape index: {}]
  %s1 = inlined_call_operand.vmem [shape: bf16[150,16], index: 1, kind: input, shape index: {}]
  %s2 = inlined_call_operand.vmem [shape: f32[1,16], index: 2, kind: input, shape index: {}]
  %s3 = inlined_call_operand.vmem [shape: bf16[25,16,120], index: 3, kind: input, shape index: {}]
  %s4 = inlined_call_operand.vmem [shape: f32[1,120], index: 4, kind: input, shape index: {}]
  %s5 = inlined_call_operand.vmem [shape: bf16[120,84], index: 5, kind: input, shape index: {}]
  %s6 = inlined_call_operand.vmem [shape: f32[1,84], index: 6, kind: input, shape index: {}]
  %s7 = inlined_call_operand.vmem [shape: bf16[84,10], index: 7, kind: input, shape index: {}]
  %s8 = inlined_call_operand.vmem [shape: f32[1,10], index: 8, kind: input, shape index: {}]
  %s9 = inlined_call_operand.hbm [shape: f32[2,10], index: 9, kind: output, shape index: {}]
  %s10 = sld [smem:[#allocation0]]
  $region46: #{lenet5_forward.3} parent=0
    _
  %s12 = ssub.s32 1, %s10
  %s13 = scalar_select 0, %s12, %s10
  $region1: #{lenet5_forward.3} parent=0
    #allocation2 [shape = 'u8[1024]{0}', space=vmem, size = 0x400, scoped, tag = 'output window, operand 0, single buffered']
    #allocation3 [shape = 's32[1]{0}', space=sflag, size = 0x4, scoped, tag = 'scoped memory for lenet5_forward.3']
    %14 = vsyncpa [#allocation3], 0
    // Predicated region
    $region2: #{lenet5_forward.3} parent=1 // pred_check
      _
    $region3: #{lenet5_forward.3} parent=1 // pred_check_branch
      %16 = sbr.rel (0) target = $region5
    $region4: #{lenet5_forward.3} parent=1 // pred_region
      _
    $region5: #{lenet5_forward.3} parent=1 // pred_fallthru
      _
    // Predicated region
    $region6: #{lenet5_forward.3} parent=1 // pred_check
      _
    $region7: #{lenet5_forward.3} parent=1 // pred_check_branch
      %18 = sbr.rel (0) target = $region9
    $region8: #{lenet5_forward.3} parent=1 // pred_region
      _
    $region9: #{lenet5_forward.3} parent=1 // pred_fallthru
      _
    // Predicated region
    $region10: #{lenet5_forward.3} parent=1 // pred_check
      _
    $region11: #{lenet5_forward.3} parent=1 // pred_check_branch
      %20 = sbr.rel (0) target = $region13
    $region12: #{lenet5_forward.3} parent=1 // pred_region
      _
    $region13: #{lenet5_forward.3} parent=1 // pred_fallthru
      _
    // Predicated region
    $region14: #{lenet5_forward.3} parent=1 // pred_check
      _
    $region15: #{lenet5_forward.3} parent=1 // pred_check_branch
      %22 = sbr.rel (0) target = $region17
    $region16: #{lenet5_forward.3} parent=1 // pred_region
      _
    $region17: #{lenet5_forward.3} parent=1 // pred_fallthru
      _
    // Predicated region
    $region18: #{lenet5_forward.3} parent=1 // pred_check
      _
    $region19: #{lenet5_forward.3} parent=1 // pred_check_branch
      %24 = sbr.rel (0) target = $region21
    $region20: #{lenet5_forward.3} parent=1 // pred_region
      _
    $region21: #{lenet5_forward.3} parent=1 // pred_fallthru
      _
    // Predicated region
    $region22: #{lenet5_forward.3} parent=1 // pred_check
      _
    $region23: #{lenet5_forward.3} parent=1 // pred_check_branch
      %26 = sbr.rel (0) target = $region25
    $region24: #{lenet5_forward.3} parent=1 // pred_region
      _
    $region25: #{lenet5_forward.3} parent=1 // pred_fallthru
      _
    // Predicated region
    $region26: #{lenet5_forward.3} parent=1 // pred_check
      _
    $region27: #{lenet5_forward.3} parent=1 // pred_check_branch
      %28 = sbr.rel (0) target = $region29
    $region28: #{lenet5_forward.3} parent=1 // pred_region
      _
    $region29: #{lenet5_forward.3} parent=1 // pred_fallthru
      _
    // Predicated region
    $region30: #{lenet5_forward.3} parent=1 // pred_check
      _
    $region31: #{lenet5_forward.3} parent=1 // pred_check_branch
      %30 = sbr.rel (0) target = $region33
    $region32: #{lenet5_forward.3} parent=1 // pred_region
      _
    $region33: #{lenet5_forward.3} parent=1 // pred_fallthru
      _
    // Predicated region
    $region34: #{lenet5_forward.3} parent=1 // pred_check
      _
    $region35: #{lenet5_forward.3} parent=1 // pred_check_branch
      %32 = sbr.rel (0) target = $region37
    $region36: #{lenet5_forward.3} parent=1 // pred_region
      _
    $region37: #{lenet5_forward.3} parent=1 // pred_fallthru
      _
    %v34 = vld [vmem:[%s0] sm:$0xff]
    %v35 = vld [vmem:[%s0 + $0x8] sm:$0xff]
    %v36 = vld [vmem:[%s0 + $0x10] sm:$0xff]
    %v37 = vld [vmem:[%s0 + $0x18] sm:$0xff]
    %v38 = vld [vmem:[%s0 + $0x20] sm:$0xff]
    %v39 = vld [vmem:[%s0 + $0x28] sm:$0xff]
    %v40 = vld [vmem:[%s0 + $0x30] sm:$0xff]
    %v41 = vld [vmem:[%s0 + $0x38] sm:$0xff]
    %v42 = vld [vmem:[%s0 + $0x40] sm:$0xff]
    %v43 = vld [vmem:[%s0 + $0x48] sm:$0xff]
    %v44 = vld [vmem:[%s0 + $0x50] sm:$0xff]
    %v45 = vld [vmem:[%s0 + $0x58] sm:$0xff]
    %v46 = vld [vmem:[%s0 + $0x60] sm:$0xff]
    %v47 = vld [vmem:[%s0 + $0x68] sm:$0xff]
    %v48 = vld [vmem:[%s0 + $0x70] sm:$0xff]
    %v49 = vld [vmem:[%s0 + $0x78] sm:$0xff]
    %v50 = vld [vmem:[%s0 + $0x80] sm:$0xff]
    %v51 = vld [vmem:[%s0 + $0x88] sm:$0xff]
    %v52 = vld [vmem:[%s0 + $0x90] sm:$0xff]
    %v53 = vld [vmem:[%s0 + $0x98] sm:$0xff]
    %v54 = vld [vmem:[%s0 + $0xa0] sm:$0xff]
    %v55 = vld [vmem:[%s0 + $0xa8] sm:$0xff]
    %v56 = vld [vmem:[%s0 + $0xb0] sm:$0xff]
    %v57 = vld [vmem:[%s0 + $0xb8] sm:$0xff]
    %v58 = vld [vmem:[%s0 + $0xc0] sm:$0xff]
    %v59 = vld [vmem:[%s0 + $0xc8] sm:$0xff]
    %v60 = vld [vmem:[%s0 + $0xd0] sm:$0xff]
    %v61 = vld [vmem:[%s0 + $0xd8] sm:$0xff]
    %v62 = vld [vmem:[%s0 + $0xe0] sm:$0xff]
    %v63 = vld [vmem:[%s0 + $0xe8] sm:$0xff]
    %v64 = vld [vmem:[%s0 + $0xf0] sm:$0xff]
    %v65 = vld [vmem:[%s0 + $0xf8] sm:$0xff]
    %v66 = vld [vmem:[%s1] sm:$0xf]
    %v67 = vld [vmem:[%s1 + $0x4] sm:$0xf]
    %v68 = vld [vmem:[%s1 + $0x8] sm:$0xf]
    %v69 = vld [vmem:[%s1 + $0xc] sm:$0xf]
    %v70 = vld [vmem:[%s1 + $0x10] sm:$0xf]
    %v71 = vld [vmem:[%s1 + $0x14] sm:$0xf]
    %v72 = vld [vmem:[%s1 + $0x18] sm:$0xf]
    %v73 = vld [vmem:[%s1 + $0x1c] sm:$0xf]
    %v74 = vld [vmem:[%s1 + $0x20] sm:$0xf]
    %v75 = vld [vmem:[%s1 + $0x24] sm:$0xf]
    %v76 = vld [vmem:[%s1 + $0x28] sm:$0xf]
    %v77 = vld [vmem:[%s1 + $0x2c] sm:$0xf]
    %v78 = vld [vmem:[%s1 + $0x30] sm:$0xf]
    %v79 = vld [vmem:[%s1 + $0x34] sm:$0xf]
    %v80 = vld [vmem:[%s1 + $0x38] sm:$0xf]
    %v81 = vld [vmem:[%s1 + $0x3c] sm:$0xf]
    %v82 = vld [vmem:[%s1 + $0x40] sm:$0xf]
    %v83 = vld [vmem:[%s1 + $0x44] sm:$0xf]
    %v84 = vld [vmem:[%s1 + $0x48] sm:$0x7]
    %v117 = vunpack.c.l.b16 %v34
    %v118 = vunpack.c.h.b16 %v34
    %v119 = vunpack.c.l.b16 %v35
    %v120 = vunpack.c.h.b16 %v35
    %v121 = vunpack.c.l.b16 %v36
    %v122 = vunpack.c.h.b16 %v36
    %v123 = vunpack.c.l.b16 %v37
    %v124 = vunpack.c.h.b16 %v37
    %v125 = vunpack.c.l.b16 %v38
    %v126 = vunpack.c.h.b16 %v38
    %v127 = vunpack.c.l.b16 %v39
    %v128 = vunpack.c.h.b16 %v39
    %v129 = vunpack.c.l.b16 %v40
    %v130 = vunpack.c.h.b16 %v40
    %v131 = vunpack.c.l.b16 %v41
    %v132 = vunpack.c.h.b16 %v41
    %v133 = vunpack.c.l.b16 %v42
    %v134 = vunpack.c.h.b16 %v42
    %v135 = vunpack.c.l.b16 %v43
    %v136 = vunpack.c.h.b16 %v43
    %v137 = vunpack.c.l.b16 %v44
    %v138 = vunpack.c.h.b16 %v44
    %v139 = vunpack.c.l.b16 %v45
    %v140 = vunpack.c.h.b16 %v45
    %v141 = vunpack.c.l.b16 %v46
    %v142 = vunpack.c.h.b16 %v46
    %v143 = vunpack.c.l.b16 %v47
    %v144 = vunpack.c.h.b16 %v47
    %v145 = vunpack.c.l.b16 %v48
    %v146 = vunpack.c.h.b16 %v48
    %v147 = vunpack.c.l.b16 %v49
    %v148 = vunpack.c.h.b16 %v49
    %v149 = vunpack.c.l.b16 %v50
    %v150 = vunpack.c.h.b16 %v50
    %v151 = vunpack.c.l.b16 %v51
    %v152 = vunpack.c.h.b16 %v51
    %v153 = vunpack.c.l.b16 %v52
    %v154 = vunpack.c.h.b16 %v52
    %v155 = vunpack.c.l.b16 %v53
    %v156 = vunpack.c.h.b16 %v53
    %v157 = vunpack.c.l.b16 %v54
    %v158 = vunpack.c.h.b16 %v54
    %v159 = vunpack.c.l.b16 %v55
    %v160 = vunpack.c.h.b16 %v55
    %v161 = vunpack.c.l.b16 %v56
    %v162 = vunpack.c.h.b16 %v56
    %v163 = vunpack.c.l.b16 %v57
    %v164 = vunpack.c.h.b16 %v57
    %v165 = vunpack.c.l.b16 %v58
    %v166 = vunpack.c.h.b16 %v58
    %v167 = vunpack.c.l.b16 %v59
    %v168 = vunpack.c.h.b16 %v59
    %v169 = vunpack.c.l.b16 %v60
    %v170 = vunpack.c.h.b16 %v60
    %v171 = vunpack.c.l.b16 %v61
    %v172 = vunpack.c.h.b16 %v61
    %v173 = vunpack.c.l.b16 %v62
    %v174 = vunpack.c.h.b16 %v62
    %v175 = vunpack.c.l.b16 %v63
    %v176 = vunpack.c.h.b16 %v63
    %v177 = vunpack.c.l.b16 %v64
    %v178 = vunpack.c.h.b16 %v64
    %v179 = vunpack.c.l.b16 %v65
    %v180 = vunpack.c.h.b16 %v65
    %v181 = vpack.c.b16 %v119, %v117
    %v182 = vpack.c.b16 %v120, %v118
    %v183 = vpack.c.b16 %v123, %v121
    %v184 = vpack.c.b16 %v124, %v122
    %v185 = vpack.c.b16 %v127, %v125
    %v186 = vpack.c.b16 %v128, %v126
    %v187 = vpack.c.b16 %v131, %v129
    %v188 = vpack.c.b16 %v132, %v130
    %v189 = vpack.c.b16 %v135, %v133
    %v190 = vpack.c.b16 %v136, %v134
    %v191 = vpack.c.b16 %v139, %v137
    %v192 = vpack.c.b16 %v140, %v138
    %v193 = vpack.c.b16 %v143, %v141
    %v194 = vpack.c.b16 %v144, %v142
    %v195 = vpack.c.b16 %v147, %v145
    %v196 = vpack.c.b16 %v148, %v146
    %v197 = vpack.c.b16 %v151, %v149
    %v198 = vpack.c.b16 %v152, %v150
    %v199 = vpack.c.b16 %v155, %v153
    %v200 = vpack.c.b16 %v156, %v154
    %v201 = vpack.c.b16 %v159, %v157
    %v202 = vpack.c.b16 %v160, %v158
    %v203 = vpack.c.b16 %v163, %v161
    %v204 = vpack.c.b16 %v164, %v162
    %v205 = vpack.c.b16 %v167, %v165
    %v206 = vpack.c.b16 %v168, %v166
    %v207 = vpack.c.b16 %v171, %v169
    %v208 = vpack.c.b16 %v172, %v170
    %v209 = vpack.c.b16 %v175, %v173
    %v210 = vpack.c.b16 %v176, %v174
    %v211 = vpack.c.b16 %v179, %v177
    %v212 = vpack.c.b16 %v180, %v178
    %v248 = vunpack.c.l.b16 %v66
    %v249 = vunpack.c.l.b16 %v67
    %v250 = vunpack.c.l.b16 %v68
    %v251 = vunpack.c.l.b16 %v69
    %v252 = vunpack.c.l.b16 %v70
    %v253 = vunpack.c.l.b16 %v71
    %v254 = vunpack.c.l.b16 %v72
    %v255 = vunpack.c.l.b16 %v73
    %v256 = vunpack.c.l.b16 %v74
    %v257 = vunpack.c.l.b16 %v75
    %v258 = vunpack.c.l.b16 %v76
    %v259 = vunpack.c.l.b16 %v77
    %v260 = vunpack.c.l.b16 %v78
    %v261 = vunpack.c.l.b16 %v79
    %v262 = vunpack.c.l.b16 %v80
    %v263 = vunpack.c.l.b16 %v81
    %v264 = vunpack.c.l.b16 %v82
    %v265 = vunpack.c.l.b16 %v83
    %v266 = vunpack.c.l.b16 %v84
    %v267 = vpack.c.b16 %v249, %v248
    %v268 = vpack.c.b16 %v251, %v250
    %v269 = vpack.c.b16 %v253, %v252
    %v270 = vpack.c.b16 %v255, %v254
    %v271 = vpack.c.b16 %v257, %v256
    %v272 = vpack.c.b16 %v259, %v258
    %v273 = vpack.c.b16 %v261, %v260
    %v274 = vpack.c.b16 %v263, %v262
    %v275 = vpack.c.b16 %v265, %v264
    %v276 = vpack.c.b16 %v266, %v266
    %vm286 = vcmask 179200
    %v288 = vsel %vm286, %v182, 0
    %v291 = vsel %vm286, %v184, 0
    %v294 = vsel %vm286, %v186, 0
    %v297 = vsel %vm286, %v188, 0
    %v300 = vsel %vm286, %v190, 0
    %v303 = vsel %vm286, %v192, 0
    %v306 = vsel %vm286, %v194, 0
    %v309 = vsel %vm286, %v196, 0
    %v312 = vsel %vm286, %v198, 0
    %v315 = vsel %vm286, %v200, 0
    %v318 = vsel %vm286, %v202, 0
    %v321 = vsel %vm286, %v204, 0
    %v324 = vsel %vm286, %v206, 0
    %v327 = vsel %vm286, %v208, 0
    %v330 = vsel %vm286, %v210, 0
    %v333 = vsel %vm286, %v212, 0
    %vm335 = vcmask 1042432
    %v337 = vsel %vm335, %v276, 0
    %339 = vmatprep.subr.bf16.mxu0 0
    %340 = vmatpush1.bf16.msra.mxu0 %v267
    %341 = vmatprep.subr.bf16.mxu0 0
    %342 = vmatpush1.bf16.msra.mxu0 %v268
    %343 = vmatprep.subr.bf16.mxu0 0
    %344 = vmatpush1.bf16.msra.mxu0 %v269
    %345 = vmatprep.subr.bf16.mxu0 0
    %346 = vmatpush1.bf16.msra.mxu0 %v270
    %347 = vmatprep.subr.bf16.mxu0 0
    %348 = vmatpush1.bf16.msra.mxu0 %v271
    %349 = vmatprep.subr.bf16.mxu0 0
    %350 = vmatpush1.bf16.msra.mxu0 %v272
    %351 = vmatprep.subr.bf16.mxu0 0
    %352 = vmatpush1.bf16.msra.mxu0 %v273
    %353 = vmatprep.subr.bf16.mxu0 0
    %354 = vmatpush1.bf16.msra.mxu0 %v274
    %355 = vmatprep.subr.bf16.mxu0 0
    %356 = vmatpush1.bf16.msra.mxu0 %v275
    %357 = vmatprep.subr.bf16.mxu0 0
    %358 = vmatpush1.bf16.msra.mxu0 %v337
    %359 = vmatprep.subr.bf16.mxu0 0
    %360 = vmatpush1.bf16.msra.mxu0 0
    %361 = vmatprep.subr.bf16.mxu0 0
    %362 = vmatpush1.bf16.msra.mxu0 0
    %363 = vmatprep.subr.bf16.mxu0 0
    %364 = vmatpush1.bf16.msra.mxu0 0
    %365 = vmatprep.subr.bf16.mxu0 0
    %366 = vmatpush1.bf16.msra.mxu0 0
    %367 = vmatprep.subr.bf16.mxu0 0
    %368 = vmatpush1.bf16.msra.mxu0 0
    %369 = vmatprep.subr.bf16.mxu0 0
    %370 = vmatpush1.bf16.msra.mxu0 0
    %371 = vmatprep.mubr.bf16.mxu0 %v288
    %372 = vmatmul.mubr.bf16.gmra.mrb[0].mxu0 %v181
    %v373 = vpop.f32.mrb[0].mxu0
    %v374 = vadd.f32 0.0, %v373
    %v375 = vpop.f32.mrb[0].mxu0
    %v376 = vpop.f32.mrb[0].mxu0
    %v377 = vadd.f32 0.0, %v376
    %v378 = vpop.f32.mrb[0].mxu0
    %379 = vmatprep.mubr.bf16.mxu0 %v291
    %380 = vmatmul.mubr.bf16.gmra.mrb[0].mxu0 %v183
    %v381 = vpop.f32.mrb[0].mxu0
    %v382 = vadd.f32 0.0, %v381
    %v383 = vpop.f32.mrb[0].mxu0
    %v384 = vpop.f32.mrb[0].mxu0
    %v385 = vadd.f32 0.0, %v384
    %v386 = vpop.f32.mrb[0].mxu0
    %387 = vmatprep.mubr.bf16.mxu0 %v294
    %388 = vmatmul.mubr.bf16.gmra.mrb[0].mxu0 %v185
    %v389 = vpop.f32.mrb[0].mxu0
    %v390 = vadd.f32 0.0, %v389
    %v391 = vpop.f32.mrb[0].mxu0
    %v392 = vpop.f32.mrb[0].mxu0
    %v393 = vadd.f32 0.0, %v392
    %v394 = vpop.f32.mrb[0].mxu0
    %395 = vmatprep.mubr.bf16.mxu0 %v297
    %396 = vmatmul.mubr.bf16.gmra.mrb[0].mxu0 %v187
    %v397 = vpop.f32.mrb[0].mxu0
    %v398 = vadd.f32 0.0, %v397
    %v399 = vpop.f32.mrb[0].mxu0
    %v400 = vpop.f32.mrb[0].mxu0
    %v401 = vadd.f32 0.0, %v400
    %v402 = vpop.f32.mrb[0].mxu0
    %403 = vmatprep.mubr.bf16.mxu0 %v300
    %404 = vmatmul.mubr.bf16.gmra.mrb[0].mxu0 %v189
    %v405 = vpop.f32.mrb[0].mxu0
    %v406 = vadd.f32 0.0, %v405
    %v407 = vpop.f32.mrb[0].mxu0
    %v408 = vpop.f32.mrb[0].mxu0
    %v409 = vadd.f32 0.0, %v408
    %v410 = vpop.f32.mrb[0].mxu0
    %411 = vmatprep.mubr.bf16.mxu0 %v303
    %412 = vmatmul.mubr.bf16.gmra.mrb[0].mxu0 %v191
    %v413 = vpop.f32.mrb[0].mxu0
    %v414 = vadd.f32 0.0, %v413
    %v415 = vpop.f32.mrb[0].mxu0
    %v416 = vpop.f32.mrb[0].mxu0
    %v417 = vadd.f32 0.0, %v416
    %v418 = vpop.f32.mrb[0].mxu0
    %419 = vmatprep.mubr.bf16.mxu0 %v306
    %420 = vmatmul.mubr.bf16.gmra.mrb[0].mxu0 %v193
    %v421 = vpop.f32.mrb[0].mxu0
    %v422 = vadd.f32 0.0, %v421
    %v423 = vpop.f32.mrb[0].mxu0
    %v424 = vpop.f32.mrb[0].mxu0
    %v425 = vadd.f32 0.0, %v424
    %v426 = vpop.f32.mrb[0].mxu0
    %427 = vmatprep.mubr.bf16.mxu0 %v309
    %428 = vmatmul.mubr.bf16.gmra.mrb[0].mxu0 %v195
    %v429 = vpop.f32.mrb[0].mxu0
    %v430 = vadd.f32 0.0, %v429
    %v431 = vpop.f32.mrb[0].mxu0
    %v432 = vpop.f32.mrb[0].mxu0
    %v433 = vadd.f32 0.0, %v432
    %v434 = vpop.f32.mrb[0].mxu0
    %435 = vmatprep.mubr.bf16.mxu0 %v312
    %436 = vmatmul.mubr.bf16.gmra.mrb[0].mxu0 %v197
    %v437 = vpop.f32.mrb[0].mxu0
    %v438 = vadd.f32 0.0, %v437
    %v439 = vpop.f32.mrb[0].mxu0
    %v440 = vpop.f32.mrb[0].mxu0
    %v441 = vadd.f32 0.0, %v440
    %v442 = vpop.f32.mrb[0].mxu0
    %443 = vmatprep.mubr.bf16.mxu0 %v315
    %444 = vmatmul.mubr.bf16.gmra.mrb[0].mxu0 %v199
    %v445 = vpop.f32.mrb[0].mxu0
    %v446 = vadd.f32 0.0, %v445
    %v447 = vpop.f32.mrb[0].mxu0
    %v448 = vpop.f32.mrb[0].mxu0
    %v449 = vadd.f32 0.0, %v448
    %v450 = vpop.f32.mrb[0].mxu0
    %451 = vmatprep.mubr.bf16.mxu0 %v318
    %452 = vmatmul.mubr.bf16.gmra.mrb[0].mxu0 %v201
    %v453 = vpop.f32.mrb[0].mxu0
    %v454 = vadd.f32 0.0, %v453
    %v455 = vpop.f32.mrb[0].mxu0
    %v456 = vpop.f32.mrb[0].mxu0
    %v457 = vadd.f32 0.0, %v456
    %v458 = vpop.f32.mrb[0].mxu0
    %459 = vmatprep.mubr.bf16.mxu0 %v321
    %460 = vmatmul.mubr.bf16.gmra.mrb[0].mxu0 %v203
    %v461 = vpop.f32.mrb[0].mxu0
    %v462 = vadd.f32 0.0, %v461
    %v463 = vpop.f32.mrb[0].mxu0
    %v464 = vpop.f32.mrb[0].mxu0
    %v465 = vadd.f32 0.0, %v464
    %v466 = vpop.f32.mrb[0].mxu0
    %467 = vmatprep.mubr.bf16.mxu0 %v324
    %468 = vmatmul.mubr.bf16.gmra.mrb[0].mxu0 %v205
    %v469 = vpop.f32.mrb[0].mxu0
    %v470 = vadd.f32 0.0, %v469
    %v471 = vpop.f32.mrb[0].mxu0
    %v472 = vpop.f32.mrb[0].mxu0
    %v473 = vadd.f32 0.0, %v472
    %v474 = vpop.f32.mrb[0].mxu0
    %475 = vmatprep.mubr.bf16.mxu0 %v327
    %476 = vmatmul.mubr.bf16.gmra.mrb[0].mxu0 %v207
    %v477 = vpop.f32.mrb[0].mxu0
    %v478 = vadd.f32 0.0, %v477
    %v479 = vpop.f32.mrb[0].mxu0
    %v480 = vpop.f32.mrb[0].mxu0
    %v481 = vadd.f32 0.0, %v480
    %v482 = vpop.f32.mrb[0].mxu0
    %483 = vmatprep.mubr.bf16.mxu0 %v330
    %484 = vmatmul.mubr.bf16.gmra.mrb[0].mxu0 %v209
    %v485 = vpop.f32.mrb[0].mxu0
    %v486 = vadd.f32 0.0, %v485
    %v487 = vpop.f32.mrb[0].mxu0
    %v488 = vpop.f32.mrb[0].mxu0
    %v489 = vadd.f32 0.0, %v488
    %v490 = vpop.f32.mrb[0].mxu0
    %491 = vmatprep.mubr.bf16.mxu0 %v333
    %492 = vmatmul.mubr.bf16.gmra.mrb[0].mxu0 %v211
    %v493 = vpop.f32.mrb[0].mxu0
    %v494 = vadd.f32 0.0, %v493
    %v495 = vpop.f32.mrb[0].mxu0
    %v496 = vpop.f32.mrb[0].mxu0
    %v497 = vadd.f32 0.0, %v496
    %v498 = vpop.f32.mrb[0].mxu0
    %499 = vdwg.mxu0
    %v500 = vmax.f32 %v374, %v406
    %v501 = vmax.f32 %v377, %v409
    %v502 = vmax.f32 %v382, %v414
    %v503 = vmax.f32 %v385, %v417
    %v504 = vmax.f32 %v390, %v422
    %v505 = vmax.f32 %v393, %v425
    %v506 = vmax.f32 %v398, %v430
    %v507 = vmax.f32 %v401, %v433
    %v508 = vmax.f32 %v438, %v470
    %v509 = vmax.f32 %v441, %v473
    %v510 = vmax.f32 %v446, %v478
    %v511 = vmax.f32 %v449, %v481
    %v512 = vmax.f32 %v454, %v486
    %v513 = vmax.f32 %v457, %v489
    %v514 = vmax.f32 %v462, %v494
    %v515 = vmax.f32 %v465, %v497
    %v516 = vmax.f32 %v500, %v508
    %v517 = vmax.f32 %v501, %v509
    %v518 = vmax.f32 %v502, %v510
    %v519 = vmax.f32 %v503, %v511
    %v520 = vmax.f32 %v504, %v512
    %v521 = vmax.f32 %v505, %v513
    %v522 = vmax.f32 %v506, %v514
    %v523 = vmax.f32 %v507, %v515
    %v524 = vld [vmem:[%s2] sm:$0x1]
    %v526 = vlaneseq
    %v527 = vshrl.u32 %v526, 7
    %v528 = vsub.s32 0, %v527
    %v529 = vrot.slane %v524, %v528
    %v531 = vadd.f32 %v516, %v529
    %v532 = vadd.f32 %v517, %v529
    %v533 = vadd.f32 %v518, %v529
    %v534 = vadd.f32 %v519, %v529
    %v535 = vadd.f32 %v520, %v529
    %v536 = vadd.f32 %v521, %v529
    %v537 = vadd.f32 %v522, %v529
    %v538 = vadd.f32 %v523, %v529
    %v539 = vtanh.pop %v531
    %v540 = vtanh.pop %v532
    %v541 = vtanh.pop %v533
    %v542 = vtanh.pop %v534
    %v543 = vtanh.pop %v535
    %v544 = vtanh.pop %v536
    %v545 = vtanh.pop %v537
    %v546 = vtanh.pop %v538
    %v547 = vpack.c.bf16 %v540, %v539
    %v548 = vpack.c.bf16 %v542, %v541
    %v549 = vpack.c.bf16 %v544, %v543
    %v550 = vpack.c.bf16 %v546, %v545
    %v551 = vld [vmem:[%s4] sm:$0x1]
    %v552 = vld [vmem:[%s3] sm:$0xf]
    %v553 = vld [vmem:[%s3 + $0x4] sm:$0xf]
    %v556 = vunpack.c.l.b16 %v552
    %v557 = vunpack.c.l.b16 %v553
    %v558 = vpack.c.b16 %v557, %v556
    %vm560 = vcmask 130048
    %v562 = vsel %vm560, %v547, 0
    %564 = vmatprep.subr.bf16.mxu0 0
    %565 = vmatpush1.bf16.msra.mxu0 %v558
    %566 = vmatprep.subr.bf16.mxu0 0
    %567 = vmatpush1.bf16.msra.mxu0 0
    %568 = vmatprep.subr.bf16.mxu0 0
    %569 = vmatpush1.bf16.msra.mxu0 0
    %570 = vmatprep.subr.bf16.mxu0 0
    %571 = vmatpush1.bf16.msra.mxu0 0
    %572 = vmatprep.subr.bf16.mxu0 0
    %573 = vmatpush1.bf16.msra.mxu0 0
    %574 = vmatprep.subr.bf16.mxu0 0
    %575 = vmatpush1.bf16.msra.mxu0 0
    %576 = vmatprep.subr.bf16.mxu0 0
    %577 = vmatpush1.bf16.msra.mxu0 0
    %578 = vmatprep.subr.bf16.mxu0 0
    %579 = vmatpush1.bf16.msra.mxu0 0
    %580 = vmatprep.subr.bf16.mxu0 0
    %581 = vmatpush1.bf16.msra.mxu0 0
    %582 = vmatprep.subr.bf16.mxu0 0
    %583 = vmatpush1.bf16.msra.mxu0 0
    %584 = vmatprep.subr.bf16.mxu0 0
    %585 = vmatpush1.bf16.msra.mxu0 0
    %586 = vmatprep.subr.bf16.mxu0 0
    %587 = vmatpush1.bf16.msra.mxu0 0
    %588 = vmatprep.subr.bf16.mxu0 0
    %589 = vmatpush1.bf16.msra.mxu0 0
    %590 = vmatprep.subr.bf16.mxu0 0
    %591 = vmatpush1.bf16.msra.mxu0 0
    %592 = vmatprep.subr.bf16.mxu0 0
    %593 = vmatpush1.bf16.msra.mxu0 0
    %594 = vmatprep.subr.bf16.mxu0 0
    %595 = vmatpush1.bf16.msra.mxu0 0
    %596 = vmatprep.mubr.bf16.mxu0 0
    %597 = vmatmul.mubr.bf16.gmra.mrb[0].mxu0 %v562
    %v598 = vpop.f32.mrb[0].mxu0
    %v599 = vadd.f32 0.0, %v598
    %v600 = vpop.f32.mrb[0].mxu0
    %v601 = vpop.f32.mrb[0].mxu0
    %v602 = vpop.f32.mrb[0].mxu0
    %603 = vdwg.mxu0
    %v605 = vlaneseq
    %v606 = vshrl.u32 %v605, 7
    %v607 = vsub.s32 0, %v606
    %v608 = vrot.slane %v551, %v607
    %v610 = vadd.f32 %v608, %v599
    %s611 = scalar_lea.vmem %s3, 8
    %v612 = vld [vmem:[%s611] sm:$0xf]
    %v613 = vld [vmem:[%s611 + $0x4] sm:$0xf]
    %v615 = vrot.slane %v547, 1
    %v618 = vunpack.c.l.b16 %v612
    %v619 = vunpack.c.l.b16 %v613
    %v620 = vpack.c.b16 %v619, %v618
    %v623 = vsel %vm560, %v615, 0
    %625 = vmatprep.subr.bf16.mxu0 0
    %626 = vmatpush1.bf16.msra.mxu0 %v620
    %627 = vmatprep.subr.bf16.mxu0 0
    %628 = vmatpush1.bf16.msra.mxu0 0
    %629 = vmatprep.subr.bf16.mxu0 0
    %630 = vmatpush1.bf16.msra.mxu0 0
    %631 = vmatprep.subr.bf16.mxu0 0
    %632 = vmatpush1.bf16.msra.mxu0 0
    %633 = vmatprep.subr.bf16.mxu0 0
    %634 = vmatpush1.bf16.msra.mxu0 0
    %635 = vmatprep.subr.bf16.mxu0 0
    %636 = vmatpush1.bf16.msra.mxu0 0
    %637 = vmatprep.subr.bf16.mxu0 0
    %638 = vmatpush1.bf16.msra.mxu0 0
    %639 = vmatprep.subr.bf16.mxu0 0
    %640 = vmatpush1.bf16.msra.mxu0 0
    %641 = vmatprep.subr.bf16.mxu0 0
    %642 = vmatpush1.bf16.msra.mxu0 0
    %643 = vmatprep.subr.bf16.mxu0 0
    %644 = vmatpush1.bf16.msra.mxu0 0
    %645 = vmatprep.subr.bf16.mxu0 0
    %646 = vmatpush1.bf16.msra.mxu0 0
    %647 = vmatprep.subr.bf16.mxu0 0
    %648 = vmatpush1.bf16.msra.mxu0 0
    %649 = vmatprep.subr.bf16.mxu0 0
    %650 = vmatpush1.bf16.msra.mxu0 0
    %651 = vmatprep.subr.bf16.mxu0 0
    %652 = vmatpush1.bf16.msra.mxu0 0
    %653 = vmatprep.subr.bf16.mxu0 0
    %654 = vmatpush1.bf16.msra.mxu0 0
    %655 = vmatprep.subr.bf16.mxu0 0
    %656 = vmatpush1.bf16.msra.mxu0 0
    %657 = vmatprep.mubr.bf16.mxu0 0
    %658 = vmatmul.mubr.bf16.gmra.mrb[0].mxu0 %v623
    %v659 = vpop.f32.mrb[0].mxu0
    %v660 = vadd.f32 0.0, %v659
    %v661 = vpop.f32.mrb[0].mxu0
    %v662 = vpop.f32.mrb[0].mxu0
    %v663 = vpop.f32.mrb[0].mxu0
    %664 = vdwg.mxu0
    %v665 = vadd.f32 %v610, %v660
    %s666 = scalar_lea.vmem %s3, 16
    %v667 = vld [vmem:[%s666] sm:$0xf]
    %v668 = vld [vmem:[%s666 + $0x4] sm:$0xf]
    %v669 = vrot.slane %v547, 2
    %v672 = vunpack.c.l.b16 %v667
    %v673 = vunpack.c.l.b16 %v668
    %v674 = vpack.c.b16 %v673, %v672
    %v677 = vsel %vm560, %v669, 0
    %679 = vmatprep.subr.bf16.mxu0 0
    %680 = vmatpush1.bf16.msra.mxu0 %v674
    %681 = vmatprep.subr.bf16.mxu0 0
    %682 = vmatpush1.bf16.msra.mxu0 0
    %683 = vmatprep.subr.bf16.mxu0 0
    %684 = vmatpush1.bf16.msra.mxu0 0
    %685 = vmatprep.subr.bf16.mxu0 0
    %686 = vmatpush1.bf16.msra.mxu0 0
    %687 = vmatprep.subr.bf16.mxu0 0
    %688 = vmatpush1.bf16.msra.mxu0 0
    %689 = vmatprep.subr.bf16.mxu0 0
    %690 = vmatpush1.bf16.msra.mxu0 0
    %691 = vmatprep.subr.bf16.mxu0 0
    %692 = vmatpush1.bf16.msra.mxu0 0
    %693 = vmatprep.subr.bf16.mxu0 0
    %694 = vmatpush1.bf16.msra.mxu0 0
    %695 = vmatprep.subr.bf16.mxu0 0
    %696 = vmatpush1.bf16.msra.mxu0 0
    %697 = vmatprep.subr.bf16.mxu0 0
    %698 = vmatpush1.bf16.msra.mxu0 0
    %699 = vmatprep.subr.bf16.mxu0 0
    %700 = vmatpush1.bf16.msra.mxu0 0
    %701 = vmatprep.subr.bf16.mxu0 0
    %702 = vmatpush1.bf16.msra.mxu0 0
    %703 = vmatprep.subr.bf16.mxu0 0
    %704 = vmatpush1.bf16.msra.mxu0 0
    %705 = vmatprep.subr.bf16.mxu0 0
    %706 = vmatpush1.bf16.msra.mxu0 0
    %707 = vmatprep.subr.bf16.mxu0 0
    %708 = vmatpush1.bf16.msra.mxu0 0
    %709 = vmatprep.subr.bf16.mxu0 0
    %710 = vmatpush1.bf16.msra.mxu0 0
    %711 = vmatprep.mubr.bf16.mxu0 0
    %712 = vmatmul.mubr.bf16.gmra.mrb[0].mxu0 %v677
    %v713 = vpop.f32.mrb[0].mxu0
    %v714 = vadd.f32 0.0, %v713
    %v715 = vpop.f32.mrb[0].mxu0
    %v716 = vpop.f32.mrb[0].mxu0
    %v717 = vpop.f32.mrb[0].mxu0
    %718 = vdwg.mxu0
    %v719 = vadd.f32 %v665, %v714
    %s720 = scalar_lea.vmem %s3, 24
    %v721 = vld [vmem:[%s720] sm:$0xf]
    %v722 = vld [vmem:[%s720 + $0x4] sm:$0xf]
    %v723 = vrot.slane %v547, 3
    %v726 = vunpack.c.l.b16 %v721
    %v727 = vunpack.c.l.b16 %v722
    %v728 = vpack.c.b16 %v727, %v726
    %v731 = vsel %vm560, %v723, 0
    %733 = vmatprep.subr.bf16.mxu0 0
    %734 = vmatpush1.bf16.msra.mxu0 %v728
    %735 = vmatprep.subr.bf16.mxu0 0
    %736 = vmatpush1.bf16.msra.mxu0 0
    %737 = vmatprep.subr.bf16.mxu0 0
    %738 = vmatpush1.bf16.msra.mxu0 0
    %739 = vmatprep.subr.bf16.mxu0 0
    %740 = vmatpush1.bf16.msra.mxu0 0
    %741 = vmatprep.subr.bf16.mxu0 0
    %742 = vmatpush1.bf16.msra.mxu0 0
    %743 = vmatprep.subr.bf16.mxu0 0
    %744 = vmatpush1.bf16.msra.mxu0 0
    %745 = vmatprep.subr.bf16.mxu0 0
    %746 = vmatpush1.bf16.msra.mxu0 0
    %747 = vmatprep.subr.bf16.mxu0 0
    %748 = vmatpush1.bf16.msra.mxu0 0
    %749 = vmatprep.subr.bf16.mxu0 0
    %750 = vmatpush1.bf16.msra.mxu0 0
    %751 = vmatprep.subr.bf16.mxu0 0
    %752 = vmatpush1.bf16.msra.mxu0 0
    %753 = vmatprep.subr.bf16.mxu0 0
    %754 = vmatpush1.bf16.msra.mxu0 0
    %755 = vmatprep.subr.bf16.mxu0 0
    %756 = vmatpush1.bf16.msra.mxu0 0
    %757 = vmatprep.subr.bf16.mxu0 0
    %758 = vmatpush1.bf16.msra.mxu0 0
    %759 = vmatprep.subr.bf16.mxu0 0
    %760 = vmatpush1.bf16.msra.mxu0 0
    %761 = vmatprep.subr.bf16.mxu0 0
    %762 = vmatpush1.bf16.msra.mxu0 0
    %763 = vmatprep.subr.bf16.mxu0 0
    %764 = vmatpush1.bf16.msra.mxu0 0
    %765 = vmatprep.mubr.bf16.mxu0 0
    %766 = vmatmul.mubr.bf16.gmra.mrb[0].mxu0 %v731
    %v767 = vpop.f32.mrb[0].mxu0
    %v768 = vadd.f32 0.0, %v767
    %v769 = vpop.f32.mrb[0].mxu0
    %v770 = vpop.f32.mrb[0].mxu0
    %v771 = vpop.f32.mrb[0].mxu0
    %772 = vdwg.mxu0
    %v773 = vadd.f32 %v719, %v768
    %s774 = scalar_lea.vmem %s3, 32
    %v775 = vld [vmem:[%s774] sm:$0xf]
    %v776 = vld [vmem:[%s774 + $0x4] sm:$0xf]
    %v777 = vrot.slane %v547, 4
    %v780 = vunpack.c.l.b16 %v775
    %v781 = vunpack.c.l.b16 %v776
    %v782 = vpack.c.b16 %v781, %v780
    %v785 = vsel %vm560, %v777, 0
    %787 = vmatprep.subr.bf16.mxu0 0
    %788 = vmatpush1.bf16.msra.mxu0 %v782
    %789 = vmatprep.subr.bf16.mxu0 0
    %790 = vmatpush1.bf16.msra.mxu0 0
    %791 = vmatprep.subr.bf16.mxu0 0
    %792 = vmatpush1.bf16.msra.mxu0 0
    %793 = vmatprep.subr.bf16.mxu0 0
    %794 = vmatpush1.bf16.msra.mxu0 0
    %795 = vmatprep.subr.bf16.mxu0 0
    %796 = vmatpush1.bf16.msra.mxu0 0
    %797 = vmatprep.subr.bf16.mxu0 0
    %798 = vmatpush1.bf16.msra.mxu0 0
    %799 = vmatprep.subr.bf16.mxu0 0
    %800 = vmatpush1.bf16.msra.mxu0 0
    %801 = vmatprep.subr.bf16.mxu0 0
    %802 = vmatpush1.bf16.msra.mxu0 0
    %803 = vmatprep.subr.bf16.mxu0 0
    %804 = vmatpush1.bf16.msra.mxu0 0
    %805 = vmatprep.subr.bf16.mxu0 0
    %806 = vmatpush1.bf16.msra.mxu0 0
    %807 = vmatprep.subr.bf16.mxu0 0
    %808 = vmatpush1.bf16.msra.mxu0 0
    %809 = vmatprep.subr.bf16.mxu0 0
    %810 = vmatpush1.bf16.msra.mxu0 0
    %811 = vmatprep.subr.bf16.mxu0 0
    %812 = vmatpush1.bf16.msra.mxu0 0
    %813 = vmatprep.subr.bf16.mxu0 0
    %814 = vmatpush1.bf16.msra.mxu0 0
    %815 = vmatprep.subr.bf16.mxu0 0
    %816 = vmatpush1.bf16.msra.mxu0 0
    %817 = vmatprep.subr.bf16.mxu0 0
    %818 = vmatpush1.bf16.msra.mxu0 0
    %819 = vmatprep.mubr.bf16.mxu0 0
    %820 = vmatmul.mubr.bf16.gmra.mrb[0].mxu0 %v785
    %v821 = vpop.f32.mrb[0].mxu0
    %v822 = vadd.f32 0.0, %v821
    %v823 = vpop.f32.mrb[0].mxu0
    %v824 = vpop.f32.mrb[0].mxu0
    %v825 = vpop.f32.mrb[0].mxu0
    %826 = vdwg.mxu0
    %v827 = vadd.f32 %v773, %v822
    %s828 = scalar_lea.vmem %s3, 40
    %v829 = vld [vmem:[%s828] sm:$0xf]
    %v830 = vld [vmem:[%s828 + $0x4] sm:$0xf]
    %v831 = vrot.slane %v547, 5
    %v834 = vunpack.c.l.b16 %v829
    %v835 = vunpack.c.l.b16 %v830
    %v836 = vpack.c.b16 %v835, %v834
    %v839 = vsel %vm560, %v831, 0
    %841 = vmatprep.subr.bf16.mxu0 0
    %842 = vmatpush1.bf16.msra.mxu0 %v836
    %843 = vmatprep.subr.bf16.mxu0 0
    %844 = vmatpush1.bf16.msra.mxu0 0
    %845 = vmatprep.subr.bf16.mxu0 0
    %846 = vmatpush1.bf16.msra.mxu0 0
    %847 = vmatprep.subr.bf16.mxu0 0
    %848 = vmatpush1.bf16.msra.mxu0 0
    %849 = vmatprep.subr.bf16.mxu0 0
    %850 = vmatpush1.bf16.msra.mxu0 0
    %851 = vmatprep.subr.bf16.mxu0 0
    %852 = vmatpush1.bf16.msra.mxu0 0
    %853 = vmatprep.subr.bf16.mxu0 0
    %854 = vmatpush1.bf16.msra.mxu0 0
    %855 = vmatprep.subr.bf16.mxu0 0
    %856 = vmatpush1.bf16.msra.mxu0 0
    %857 = vmatprep.subr.bf16.mxu0 0
    %858 = vmatpush1.bf16.msra.mxu0 0
    %859 = vmatprep.subr.bf16.mxu0 0
    %860 = vmatpush1.bf16.msra.mxu0 0
    %861 = vmatprep.subr.bf16.mxu0 0
    %862 = vmatpush1.bf16.msra.mxu0 0
    %863 = vmatprep.subr.bf16.mxu0 0
    %864 = vmatpush1.bf16.msra.mxu0 0
    %865 = vmatprep.subr.bf16.mxu0 0
    %866 = vmatpush1.bf16.msra.mxu0 0
    %867 = vmatprep.subr.bf16.mxu0 0
    %868 = vmatpush1.bf16.msra.mxu0 0
    %869 = vmatprep.subr.bf16.mxu0 0
    %870 = vmatpush1.bf16.msra.mxu0 0
    %871 = vmatprep.subr.bf16.mxu0 0
    %872 = vmatpush1.bf16.msra.mxu0 0
    %873 = vmatprep.mubr.bf16.mxu0 0
    %874 = vmatmul.mubr.bf16.gmra.mrb[0].mxu0 %v839
    %v875 = vpop.f32.mrb[0].mxu0
    %v876 = vadd.f32 0.0, %v875
    %v877 = vpop.f32.mrb[0].mxu0
    %v878 = vpop.f32.mrb[0].mxu0
    %v879 = vpop.f32.mrb[0].mxu0
    %880 = vdwg.mxu0
    %v881 = vadd.f32 %v827, %v876
    %s882 = scalar_lea.vmem %s3, 48
    %v883 = vld [vmem:[%s882] sm:$0xf]
    %v884 = vld [vmem:[%s882 + $0x4] sm:$0xf]
    %v885 = vrot.slane %v547, 6
    %v888 = vunpack.c.l.b16 %v883
    %v889 = vunpack.c.l.b16 %v884
    %v890 = vpack.c.b16 %v889, %v888
    %v893 = vsel %vm560, %v885, 0
    %895 = vmatprep.subr.bf16.mxu0 0
    %896 = vmatpush1.bf16.msra.mxu0 %v890
    %897 = vmatprep.subr.bf16.mxu0 0
    %898 = vmatpush1.bf16.msra.mxu0 0
    %899 = vmatprep.subr.bf16.mxu0 0
    %900 = vmatpush1.bf16.msra.mxu0 0
    %901 = vmatprep.subr.bf16.mxu0 0
    %902 = vmatpush1.bf16.msra.mxu0 0
    %903 = vmatprep.subr.bf16.mxu0 0
    %904 = vmatpush1.bf16.msra.mxu0 0
    %905 = vmatprep.subr.bf16.mxu0 0
    %906 = vmatpush1.bf16.msra.mxu0 0
    %907 = vmatprep.subr.bf16.mxu0 0
    %908 = vmatpush1.bf16.msra.mxu0 0
    %909 = vmatprep.subr.bf16.mxu0 0
    %910 = vmatpush1.bf16.msra.mxu0 0
    %911 = vmatprep.subr.bf16.mxu0 0
    %912 = vmatpush1.bf16.msra.mxu0 0
    %913 = vmatprep.subr.bf16.mxu0 0
    %914 = vmatpush1.bf16.msra.mxu0 0
    %915 = vmatprep.subr.bf16.mxu0 0
    %916 = vmatpush1.bf16.msra.mxu0 0
    %917 = vmatprep.subr.bf16.mxu0 0
    %918 = vmatpush1.bf16.msra.mxu0 0
    %919 = vmatprep.subr.bf16.mxu0 0
    %920 = vmatpush1.bf16.msra.mxu0 0
    %921 = vmatprep.subr.bf16.mxu0 0
    %922 = vmatpush1.bf16.msra.mxu0 0
    %923 = vmatprep.subr.bf16.mxu0 0
    %924 = vmatpush1.bf16.msra.mxu0 0
    %925 = vmatprep.subr.bf16.mxu0 0
    %926 = vmatpush1.bf16.msra.mxu0 0
    %927 = vmatprep.mubr.bf16.mxu0 0
    %928 = vmatmul.mubr.bf16.gmra.mrb[0].mxu0 %v893
    %v929 = vpop.f32.mrb[0].mxu0
    %v930 = vadd.f32 0.0, %v929
    %v931 = vpop.f32.mrb[0].mxu0
    %v932 = vpop.f32.mrb[0].mxu0
    %v933 = vpop.f32.mrb[0].mxu0
    %934 = vdwg.mxu0
    %v935 = vadd.f32 %v881, %v930
    %s936 = scalar_lea.vmem %s3, 56
    %v937 = vld [vmem:[%s936] sm:$0xf]
    %v938 = vld [vmem:[%s936 + $0x4] sm:$0xf]
    %v939 = vrot.slane %v547, 7
    %v942 = vunpack.c.l.b16 %v937
    %v943 = vunpack.c.l.b16 %v938
    %v944 = vpack.c.b16 %v943, %v942
    %v947 = vsel %vm560, %v939, 0
    %949 = vmatprep.subr.bf16.mxu0 0
    %950 = vmatpush1.bf16.msra.mxu0 %v944
    %951 = vmatprep.subr.bf16.mxu0 0
    %952 = vmatpush1.bf16.msra.mxu0 0
    %953 = vmatprep.subr.bf16.mxu0 0
    %954 = vmatpush1.bf16.msra.mxu0 0
    %955 = vmatprep.subr.bf16.mxu0 0
    %956 = vmatpush1.bf16.msra.mxu0 0
    %957 = vmatprep.subr.bf16.mxu0 0
    %958 = vmatpush1.bf16.msra.mxu0 0
    %959 = vmatprep.subr.bf16.mxu0 0
    %960 = vmatpush1.bf16.msra.mxu0 0
    %961 = vmatprep.subr.bf16.mxu0 0
    %962 = vmatpush1.bf16.msra.mxu0 0
    %963 = vmatprep.subr.bf16.mxu0 0
    %964 = vmatpush1.bf16.msra.mxu0 0
    %965 = vmatprep.subr.bf16.mxu0 0
    %966 = vmatpush1.bf16.msra.mxu0 0
    %967 = vmatprep.subr.bf16.mxu0 0
    %968 = vmatpush1.bf16.msra.mxu0 0
    %969 = vmatprep.subr.bf16.mxu0 0
    %970 = vmatpush1.bf16.msra.mxu0 0
    %971 = vmatprep.subr.bf16.mxu0 0
    %972 = vmatpush1.bf16.msra.mxu0 0
    %973 = vmatprep.subr.bf16.mxu0 0
    %974 = vmatpush1.bf16.msra.mxu0 0
    %975 = vmatprep.subr.bf16.mxu0 0
    %976 = vmatpush1.bf16.msra.mxu0 0
    %977 = vmatprep.subr.bf16.mxu0 0
    %978 = vmatpush1.bf16.msra.mxu0 0
    %979 = vmatprep.subr.bf16.mxu0 0
    %980 = vmatpush1.bf16.msra.mxu0 0
    %981 = vmatprep.mubr.bf16.mxu0 0
    %982 = vmatmul.mubr.bf16.gmra.mrb[0].mxu0 %v947
    %v983 = vpop.f32.mrb[0].mxu0
    %v984 = vadd.f32 0.0, %v983
    %v985 = vpop.f32.mrb[0].mxu0
    %v986 = vpop.f32.mrb[0].mxu0
    %v987 = vpop.f32.mrb[0].mxu0
    %988 = vdwg.mxu0
    %v989 = vadd.f32 %v935, %v984
    %s990 = scalar_lea.vmem %s3, 64
    %v991 = vld [vmem:[%s990] sm:$0xf]
    %v992 = vld [vmem:[%s990 + $0x4] sm:$0xf]
    %v995 = vunpack.c.l.b16 %v991
    %v996 = vunpack.c.l.b16 %v992
    %v997 = vpack.c.b16 %v996, %v995
    %v1000 = vsel %vm560, %v548, 0
    %1002 = vmatprep.subr.bf16.mxu0 0
    %1003 = vmatpush1.bf16.msra.mxu0 %v997
    %1004 = vmatprep.subr.bf16.mxu0 0
    %1005 = vmatpush1.bf16.msra.mxu0 0
    %1006 = vmatprep.subr.bf16.mxu0 0
    %1007 = vmatpush1.bf16.msra.mxu0 0
    %1008 = vmatprep.subr.bf16.mxu0 0
    %1009 = vmatpush1.bf16.msra.mxu0 0
    %1010 = vmatprep.subr.bf16.mxu0 0
    %1011 = vmatpush1.bf16.msra.mxu0 0
    %1012 = vmatprep.subr.bf16.mxu0 0
    %1013 = vmatpush1.bf16.msra.mxu0 0
    %1014 = vmatprep.subr.bf16.mxu0 0
    %1015 = vmatpush1.bf16.msra.mxu0 0
    %1016 = vmatprep.subr.bf16.mxu0 0
    %1017 = vmatpush1.bf16.msra.mxu0 0
    %1018 = vmatprep.subr.bf16.mxu0 0
    %1019 = vmatpush1.bf16.msra.mxu0 0
    %1020 = vmatprep.subr.bf16.mxu0 0
    %1021 = vmatpush1.bf16.msra.mxu0 0
    %1022 = vmatprep.subr.bf16.mxu0 0
    %1023 = vmatpush1.bf16.msra.mxu0 0
    %1024 = vmatprep.subr.bf16.mxu0 0
    %1025 = vmatpush1.bf16.msra.mxu0 0
    %1026 = vmatprep.subr.bf16.mxu0 0
    %1027 = vmatpush1.bf16.msra.mxu0 0
    %1028 = vmatprep.subr.bf16.mxu0 0
    %1029 = vmatpush1.bf16.msra.mxu0 0
    %1030 = vmatprep.subr.bf16.mxu0 0
    %1031 = vmatpush1.bf16.msra.mxu0 0
    %1032 = vmatprep.subr.bf16.mxu0 0
    %1033 = vmatpush1.bf16.msra.mxu0 0
    %1034 = vmatprep.mubr.bf16.mxu0 0
    %1035 = vmatmul.mubr.bf16.gmra.mrb[0].mxu0 %v1000
    %v1036 = vpop.f32.mrb[0].mxu0
    %v1037 = vadd.f32 0.0, %v1036
    %v1038 = vpop.f32.mrb[0].mxu0
    %v1039 = vpop.f32.mrb[0].mxu0
    %v1040 = vpop.f32.mrb[0].mxu0
    %1041 = vdwg.mxu0
    %v1042 = vadd.f32 %v989, %v1037
    %s1043 = scalar_lea.vmem %s3, 72
    %v1044 = vld [vmem:[%s1043] sm:$0xf]
    %v1045 = vld [vmem:[%s1043 + $0x4] sm:$0xf]
    %v1047 = vrot.slane %v548, 1
    %v1050 = vunpack.c.l.b16 %v1044
    %v1051 = vunpack.c.l.b16 %v1045
    %v1052 = vpack.c.b16 %v1051, %v1050
    %v1055 = vsel %vm560, %v1047, 0
    %1057 = vmatprep.subr.bf16.mxu0 0
    %1058 = vmatpush1.bf16.msra.mxu0 %v1052
    %1059 = vmatprep.subr.bf16.mxu0 0
    %1060 = vmatpush1.bf16.msra.mxu0 0
    %1061 = vmatprep.subr.bf16.mxu0 0
    %1062 = vmatpush1.bf16.msra.mxu0 0
    %1063 = vmatprep.subr.bf16.mxu0 0
    %1064 = vmatpush1.bf16.msra.mxu0 0
    %1065 = vmatprep.subr.bf16.mxu0 0
    %1066 = vmatpush1.bf16.msra.mxu0 0
    %1067 = vmatprep.subr.bf16.mxu0 0
    %1068 = vmatpush1.bf16.msra.mxu0 0
    %1069 = vmatprep.subr.bf16.mxu0 0
    %1070 = vmatpush1.bf16.msra.mxu0 0
    %1071 = vmatprep.subr.bf16.mxu0 0
    %1072 = vmatpush1.bf16.msra.mxu0 0
    %1073 = vmatprep.subr.bf16.mxu0 0
    %1074 = vmatpush1.bf16.msra.mxu0 0
    %1075 = vmatprep.subr.bf16.mxu0 0
    %1076 = vmatpush1.bf16.msra.mxu0 0
    %1077 = vmatprep.subr.bf16.mxu0 0
    %1078 = vmatpush1.bf16.msra.mxu0 0
    %1079 = vmatprep.subr.bf16.mxu0 0
    %1080 = vmatpush1.bf16.msra.mxu0 0
    %1081 = vmatprep.subr.bf16.mxu0 0
    %1082 = vmatpush1.bf16.msra.mxu0 0
    %1083 = vmatprep.subr.bf16.mxu0 0
    %1084 = vmatpush1.bf16.msra.mxu0 0
    %1085 = vmatprep.subr.bf16.mxu0 0
    %1086 = vmatpush1.bf16.msra.mxu0 0
    %1087 = vmatprep.subr.bf16.mxu0 0
    %1088 = vmatpush1.bf16.msra.mxu0 0
    %1089 = vmatprep.mubr.bf16.mxu0 0
    %1090 = vmatmul.mubr.bf16.gmra.mrb[0].mxu0 %v1055
    %v1091 = vpop.f32.mrb[0].mxu0
    %v1092 = vadd.f32 0.0, %v1091
    %v1093 = vpop.f32.mrb[0].mxu0
    %v1094 = vpop.f32.mrb[0].mxu0
    %v1095 = vpop.f32.mrb[0].mxu0
    %1096 = vdwg.mxu0
    %v1097 = vadd.f32 %v1042, %v1092
    %s1098 = scalar_lea.vmem %s3, 80
    %v1099 = vld [vmem:[%s1098] sm:$0xf]
    %v1100 = vld [vmem:[%s1098 + $0x4] sm:$0xf]
    %v1101 = vrot.slane %v548, 2
    %v1104 = vunpack.c.l.b16 %v1099
    %v1105 = vunpack.c.l.b16 %v1100
    %v1106 = vpack.c.b16 %v1105, %v1104
    %v1109 = vsel %vm560, %v1101, 0
    %1111 = vmatprep.subr.bf16.mxu0 0
    %1112 = vmatpush1.bf16.msra.mxu0 %v1106
    %1113 = vmatprep.subr.bf16.mxu0 0
    %1114 = vmatpush1.bf16.msra.mxu0 0
    %1115 = vmatprep.subr.bf16.mxu0 0
    %1116 = vmatpush1.bf16.msra.mxu0 0
    %1117 = vmatprep.subr.bf16.mxu0 0
    %1118 = vmatpush1.bf16.msra.mxu0 0
    %1119 = vmatprep.subr.bf16.mxu0 0
    %1120 = vmatpush1.bf16.msra.mxu0 0
    %1121 = vmatprep.subr.bf16.mxu0 0
    %1122 = vmatpush1.bf16.msra.mxu0 0
    %1123 = vmatprep.subr.bf16.mxu0 0
    %1124 = vmatpush1.bf16.msra.mxu0 0
    %1125 = vmatprep.subr.bf16.mxu0 0
    %1126 = vmatpush1.bf16.msra.mxu0 0
    %1127 = vmatprep.subr.bf16.mxu0 0
    %1128 = vmatpush1.bf16.msra.mxu0 0
    %1129 = vmatprep.subr.bf16.mxu0 0
    %1130 = vmatpush1.bf16.msra.mxu0 0
    %1131 = vmatprep.subr.bf16.mxu0 0
    %1132 = vmatpush1.bf16.msra.mxu0 0
    %1133 = vmatprep.subr.bf16.mxu0 0
    %1134 = vmatpush1.bf16.msra.mxu0 0
    %1135 = vmatprep.subr.bf16.mxu0 0
    %1136 = vmatpush1.bf16.msra.mxu0 0
    %1137 = vmatprep.subr.bf16.mxu0 0
    %1138 = vmatpush1.bf16.msra.mxu0 0
    %1139 = vmatprep.subr.bf16.mxu0 0
    %1140 = vmatpush1.bf16.msra.mxu0 0
    %1141 = vmatprep.subr.bf16.mxu0 0
    %1142 = vmatpush1.bf16.msra.mxu0 0
    %1143 = vmatprep.mubr.bf16.mxu0 0
    %1144 = vmatmul.mubr.bf16.gmra.mrb[0].mxu0 %v1109
    %v1145 = vpop.f32.mrb[0].mxu0
    %v1146 = vadd.f32 0.0, %v1145
    %v1147 = vpop.f32.mrb[0].mxu0
    %v1148 = vpop.f32.mrb[0].mxu0
    %v1149 = vpop.f32.mrb[0].mxu0
    %1150 = vdwg.mxu0
    %v1151 = vadd.f32 %v1097, %v1146
    %s1152 = scalar_lea.vmem %s3, 88
    %v1153 = vld [vmem:[%s1152] sm:$0xf]
    %v1154 = vld [vmem:[%s1152 + $0x4] sm:$0xf]
    %v1155 = vrot.slane %v548, 3
    %v1158 = vunpack.c.l.b16 %v1153
    %v1159 = vunpack.c.l.b16 %v1154
    %v1160 = vpack.c.b16 %v1159, %v1158
    %v1163 = vsel %vm560, %v1155, 0
    %1165 = vmatprep.subr.bf16.mxu0 0
    %1166 = vmatpush1.bf16.msra.mxu0 %v1160
    %1167 = vmatprep.subr.bf16.mxu0 0
    %1168 = vmatpush1.bf16.msra.mxu0 0
    %1169 = vmatprep.subr.bf16.mxu0 0
    %1170 = vmatpush1.bf16.msra.mxu0 0
    %1171 = vmatprep.subr.bf16.mxu0 0
    %1172 = vmatpush1.bf16.msra.mxu0 0
    %1173 = vmatprep.subr.bf16.mxu0 0
    %1174 = vmatpush1.bf16.msra.mxu0 0
    %1175 = vmatprep.subr.bf16.mxu0 0
    %1176 = vmatpush1.bf16.msra.mxu0 0
    %1177 = vmatprep.subr.bf16.mxu0 0
    %1178 = vmatpush1.bf16.msra.mxu0 0
    %1179 = vmatprep.subr.bf16.mxu0 0
    %1180 = vmatpush1.bf16.msra.mxu0 0
    %1181 = vmatprep.subr.bf16.mxu0 0
    %1182 = vmatpush1.bf16.msra.mxu0 0
    %1183 = vmatprep.subr.bf16.mxu0 0
    %1184 = vmatpush1.bf16.msra.mxu0 0
    %1185 = vmatprep.subr.bf16.mxu0 0
    %1186 = vmatpush1.bf16.msra.mxu0 0
    %1187 = vmatprep.subr.bf16.mxu0 0
    %1188 = vmatpush1.bf16.msra.mxu0 0
    %1189 = vmatprep.subr.bf16.mxu0 0
    %1190 = vmatpush1.bf16.msra.mxu0 0
    %1191 = vmatprep.subr.bf16.mxu0 0
    %1192 = vmatpush1.bf16.msra.mxu0 0
    %1193 = vmatprep.subr.bf16.mxu0 0
    %1194 = vmatpush1.bf16.msra.mxu0 0
    %1195 = vmatprep.subr.bf16.mxu0 0
    %1196 = vmatpush1.bf16.msra.mxu0 0
    %1197 = vmatprep.mubr.bf16.mxu0 0
    %1198 = vmatmul.mubr.bf16.gmra.mrb[0].mxu0 %v1163
    %v1199 = vpop.f32.mrb[0].mxu0
    %v1200 = vadd.f32 0.0, %v1199
    %v1201 = vpop.f32.mrb[0].mxu0
    %v1202 = vpop.f32.mrb[0].mxu0
    %v1203 = vpop.f32.mrb[0].mxu0
    %1204 = vdwg.mxu0
    %v1205 = vadd.f32 %v1151, %v1200
    %s1206 = scalar_lea.vmem %s3, 96
    %v1207 = vld [vmem:[%s1206] sm:$0xf]
    %v1208 = vld [vmem:[%s1206 + $0x4] sm:$0xf]
    %v1209 = vrot.slane %v548, 4
    %v1212 = vunpack.c.l.b16 %v1207
    %v1213 = vunpack.c.l.b16 %v1208
    %v1214 = vpack.c.b16 %v1213, %v1212
    %v1217 = vsel %vm560, %v1209, 0
    %1219 = vmatprep.subr.bf16.mxu0 0
    %1220 = vmatpush1.bf16.msra.mxu0 %v1214
    %1221 = vmatprep.subr.bf16.mxu0 0
    %1222 = vmatpush1.bf16.msra.mxu0 0
    %1223 = vmatprep.subr.bf16.mxu0 0
    %1224 = vmatpush1.bf16.msra.mxu0 0
    %1225 = vmatprep.subr.bf16.mxu0 0
    %1226 = vmatpush1.bf16.msra.mxu0 0
    %1227 = vmatprep.subr.bf16.mxu0 0
    %1228 = vmatpush1.bf16.msra.mxu0 0
    %1229 = vmatprep.subr.bf16.mxu0 0
    %1230 = vmatpush1.bf16.msra.mxu0 0
    %1231 = vmatprep.subr.bf16.mxu0 0
    %1232 = vmatpush1.bf16.msra.mxu0 0
    %1233 = vmatprep.subr.bf16.mxu0 0
    %1234 = vmatpush1.bf16.msra.mxu0 0
    %1235 = vmatprep.subr.bf16.mxu0 0
    %1236 = vmatpush1.bf16.msra.mxu0 0
    %1237 = vmatprep.subr.bf16.mxu0 0
    %1238 = vmatpush1.bf16.msra.mxu0 0
    %1239 = vmatprep.subr.bf16.mxu0 0
    %1240 = vmatpush1.bf16.msra.mxu0 0
    %1241 = vmatprep.subr.bf16.mxu0 0
    %1242 = vmatpush1.bf16.msra.mxu0 0
    %1243 = vmatprep.subr.bf16.mxu0 0
    %1244 = vmatpush1.bf16.msra.mxu0 0
    %1245 = vmatprep.subr.bf16.mxu0 0
    %1246 = vmatpush1.bf16.msra.mxu0 0
    %1247 = vmatprep.subr.bf16.mxu0 0
    %1248 = vmatpush1.bf16.msra.mxu0 0
    %1249 = vmatprep.subr.bf16.mxu0 0
    %1250 = vmatpush1.bf16.msra.mxu0 0
    %1251 = vmatprep.mubr.bf16.mxu0 0
    %1252 = vmatmul.mubr.bf16.gmra.mrb[0].mxu0 %v1217
    %v1253 = vpop.f32.mrb[0].mxu0
    %v1254 = vadd.f32 0.0, %v1253
    %v1255 = vpop.f32.mrb[0].mxu0
    %v1256 = vpop.f32.mrb[0].mxu0
    %v1257 = vpop.f32.mrb[0].mxu0
    %1258 = vdwg.mxu0
    %v1259 = vadd.f32 %v1205, %v1254
    %s1260 = scalar_lea.vmem %s3, 104
    %v1261 = vld [vmem:[%s1260] sm:$0xf]
    %v1262 = vld [vmem:[%s1260 + $0x4] sm:$0xf]
    %v1263 = vrot.slane %v548, 5
    %v1266 = vunpack.c.l.b16 %v1261
    %v1267 = vunpack.c.l.b16 %v1262
    %v1268 = vpack.c.b16 %v1267, %v1266
    %v1271 = vsel %vm560, %v1263, 0
    %1273 = vmatprep.subr.bf16.mxu0 0
    %1274 = vmatpush1.bf16.msra.mxu0 %v1268
    %1275 = vmatprep.subr.bf16.mxu0 0
    %1276 = vmatpush1.bf16.msra.mxu0 0
    %1277 = vmatprep.subr.bf16.mxu0 0
    %1278 = vmatpush1.bf16.msra.mxu0 0
    %1279 = vmatprep.subr.bf16.mxu0 0
    %1280 = vmatpush1.bf16.msra.mxu0 0
    %1281 = vmatprep.subr.bf16.mxu0 0
    %1282 = vmatpush1.bf16.msra.mxu0 0
    %1283 = vmatprep.subr.bf16.mxu0 0
    %1284 = vmatpush1.bf16.msra.mxu0 0
    %1285 = vmatprep.subr.bf16.mxu0 0
    %1286 = vmatpush1.bf16.msra.mxu0 0
    %1287 = vmatprep.subr.bf16.mxu0 0
    %1288 = vmatpush1.bf16.msra.mxu0 0
    %1289 = vmatprep.subr.bf16.mxu0 0
    %1290 = vmatpush1.bf16.msra.mxu0 0
    %1291 = vmatprep.subr.bf16.mxu0 0
    %1292 = vmatpush1.bf16.msra.mxu0 0
    %1293 = vmatprep.subr.bf16.mxu0 0
    %1294 = vmatpush1.bf16.msra.mxu0 0
    %1295 = vmatprep.subr.bf16.mxu0 0
    %1296 = vmatpush1.bf16.msra.mxu0 0
    %1297 = vmatprep.subr.bf16.mxu0 0
    %1298 = vmatpush1.bf16.msra.mxu0 0
    %1299 = vmatprep.subr.bf16.mxu0 0
    %1300 = vmatpush1.bf16.msra.mxu0 0
    %1301 = vmatprep.subr.bf16.mxu0 0
    %1302 = vmatpush1.bf16.msra.mxu0 0
    %1303 = vmatprep.subr.bf16.mxu0 0
    %1304 = vmatpush1.bf16.msra.mxu0 0
    %1305 = vmatprep.mubr.bf16.mxu0 0
    %1306 = vmatmul.mubr.bf16.gmra.mrb[0].mxu0 %v1271
    %v1307 = vpop.f32.mrb[0].mxu0
    %v1308 = vadd.f32 0.0, %v1307
    %v1309 = vpop.f32.mrb[0].mxu0
    %v1310 = vpop.f32.mrb[0].mxu0
    %v1311 = vpop.f32.mrb[0].mxu0
    %1312 = vdwg.mxu0
    %v1313 = vadd.f32 %v1259, %v1308
    %s1314 = scalar_lea.vmem %s3, 112
    %v1315 = vld [vmem:[%s1314] sm:$0xf]
    %v1316 = vld [vmem:[%s1314 + $0x4] sm:$0xf]
    %v1317 = vrot.slane %v548, 6
    %v1320 = vunpack.c.l.b16 %v1315
    %v1321 = vunpack.c.l.b16 %v1316
    %v1322 = vpack.c.b16 %v1321, %v1320
    %v1325 = vsel %vm560, %v1317, 0
    %1327 = vmatprep.subr.bf16.mxu0 0
    %1328 = vmatpush1.bf16.msra.mxu0 %v1322
    %1329 = vmatprep.subr.bf16.mxu0 0
    %1330 = vmatpush1.bf16.msra.mxu0 0
    %1331 = vmatprep.subr.bf16.mxu0 0
    %1332 = vmatpush1.bf16.msra.mxu0 0
    %1333 = vmatprep.subr.bf16.mxu0 0
    %1334 = vmatpush1.bf16.msra.mxu0 0
    %1335 = vmatprep.subr.bf16.mxu0 0
    %1336 = vmatpush1.bf16.msra.mxu0 0
    %1337 = vmatprep.subr.bf16.mxu0 0
    %1338 = vmatpush1.bf16.msra.mxu0 0
    %1339 = vmatprep.subr.bf16.mxu0 0
    %1340 = vmatpush1.bf16.msra.mxu0 0
    %1341 = vmatprep.subr.bf16.mxu0 0
    %1342 = vmatpush1.bf16.msra.mxu0 0
    %1343 = vmatprep.subr.bf16.mxu0 0
    %1344 = vmatpush1.bf16.msra.mxu0 0
    %1345 = vmatprep.subr.bf16.mxu0 0
    %1346 = vmatpush1.bf16.msra.mxu0 0
    %1347 = vmatprep.subr.bf16.mxu0 0
    %1348 = vmatpush1.bf16.msra.mxu0 0
    %1349 = vmatprep.subr.bf16.mxu0 0
    %1350 = vmatpush1.bf16.msra.mxu0 0
    %1351 = vmatprep.subr.bf16.mxu0 0
    %1352 = vmatpush1.bf16.msra.mxu0 0
    %1353 = vmatprep.subr.bf16.mxu0 0
    %1354 = vmatpush1.bf16.msra.mxu0 0
    %1355 = vmatprep.subr.bf16.mxu0 0
    %1356 = vmatpush1.bf16.msra.mxu0 0
    %1357 = vmatprep.subr.bf16.mxu0 0
    %1358 = vmatpush1.bf16.msra.mxu0 0
    %1359 = vmatprep.mubr.bf16.mxu0 0
    %1360 = vmatmul.mubr.bf16.gmra.mrb[0].mxu0 %v1325
    %v1361 = vpop.f32.mrb[0].mxu0
    %v1362 = vadd.f32 0.0, %v1361
    %v1363 = vpop.f32.mrb[0].mxu0
    %v1364 = vpop.f32.mrb[0].mxu0
    %v1365 = vpop.f32.mrb[0].mxu0
    %1366 = vdwg.mxu0
    %v1367 = vadd.f32 %v1313, %v1362
    %s1368 = scalar_lea.vmem %s3, 120
    %v1369 = vld [vmem:[%s1368] sm:$0xf]
    %v1370 = vld [vmem:[%s1368 + $0x4] sm:$0xf]
    %v1371 = vrot.slane %v548, 7
    %v1374 = vunpack.c.l.b16 %v1369
    %v1375 = vunpack.c.l.b16 %v1370
    %v1376 = vpack.c.b16 %v1375, %v1374
    %v1379 = vsel %vm560, %v1371, 0
    %1381 = vmatprep.subr.bf16.mxu0 0
    %1382 = vmatpush1.bf16.msra.mxu0 %v1376
    %1383 = vmatprep.subr.bf16.mxu0 0
    %1384 = vmatpush1.bf16.msra.mxu0 0
    %1385 = vmatprep.subr.bf16.mxu0 0
    %1386 = vmatpush1.bf16.msra.mxu0 0
    %1387 = vmatprep.subr.bf16.mxu0 0
    %1388 = vmatpush1.bf16.msra.mxu0 0
    %1389 = vmatprep.subr.bf16.mxu0 0
    %1390 = vmatpush1.bf16.msra.mxu0 0
    %1391 = vmatprep.subr.bf16.mxu0 0
    %1392 = vmatpush1.bf16.msra.mxu0 0
    %1393 = vmatprep.subr.bf16.mxu0 0
    %1394 = vmatpush1.bf16.msra.mxu0 0
    %1395 = vmatprep.subr.bf16.mxu0 0
    %1396 = vmatpush1.bf16.msra.mxu0 0
    %1397 = vmatprep.subr.bf16.mxu0 0
    %1398 = vmatpush1.bf16.msra.mxu0 0
    %1399 = vmatprep.subr.bf16.mxu0 0
    %1400 = vmatpush1.bf16.msra.mxu0 0
    %1401 = vmatprep.subr.bf16.mxu0 0
    %1402 = vmatpush1.bf16.msra.mxu0 0
    %1403 = vmatprep.subr.bf16.mxu0 0
    %1404 = vmatpush1.bf16.msra.mxu0 0
    %1405 = vmatprep.subr.bf16.mxu0 0
    %1406 = vmatpush1.bf16.msra.mxu0 0
    %1407 = vmatprep.subr.bf16.mxu0 0
    %1408 = vmatpush1.bf16.msra.mxu0 0
    %1409 = vmatprep.subr.bf16.mxu0 0
    %1410 = vmatpush1.bf16.msra.mxu0 0
    %1411 = vmatprep.subr.bf16.mxu0 0
    %1412 = vmatpush1.bf16.msra.mxu0 0
    %1413 = vmatprep.mubr.bf16.mxu0 0
    %1414 = vmatmul.mubr.bf16.gmra.mrb[0].mxu0 %v1379
    %v1415 = vpop.f32.mrb[0].mxu0
    %v1416 = vadd.f32 0.0, %v1415
    %v1417 = vpop.f32.mrb[0].mxu0
    %v1418 = vpop.f32.mrb[0].mxu0
    %v1419 = vpop.f32.mrb[0].mxu0
    %1420 = vdwg.mxu0
    %v1421 = vadd.f32 %v1367, %v1416
    %s1422 = scalar_lea.vmem %s3, 128
    %v1423 = vld [vmem:[%s1422] sm:$0xf]
    %v1424 = vld [vmem:[%s1422 + $0x4] sm:$0xf]
    %v1427 = vunpack.c.l.b16 %v1423
    %v1428 = vunpack.c.l.b16 %v1424
    %v1429 = vpack.c.b16 %v1428, %v1427
    %v1432 = vsel %vm560, %v549, 0
    %1434 = vmatprep.subr.bf16.mxu0 0
    %1435 = vmatpush1.bf16.msra.mxu0 %v1429
    %1436 = vmatprep.subr.bf16.mxu0 0
    %1437 = vmatpush1.bf16.msra.mxu0 0
    %1438 = vmatprep.subr.bf16.mxu0 0
    %1439 = vmatpush1.bf16.msra.mxu0 0
    %1440 = vmatprep.subr.bf16.mxu0 0
    %1441 = vmatpush1.bf16.msra.mxu0 0
    %1442 = vmatprep.subr.bf16.mxu0 0
    %1443 = vmatpush1.bf16.msra.mxu0 0
    %1444 = vmatprep.subr.bf16.mxu0 0
    %1445 = vmatpush1.bf16.msra.mxu0 0
    %1446 = vmatprep.subr.bf16.mxu0 0
    %1447 = vmatpush1.bf16.msra.mxu0 0
    %1448 = vmatprep.subr.bf16.mxu0 0
    %1449 = vmatpush1.bf16.msra.mxu0 0
    %1450 = vmatprep.subr.bf16.mxu0 0
    %1451 = vmatpush1.bf16.msra.mxu0 0
    %1452 = vmatprep.subr.bf16.mxu0 0
    %1453 = vmatpush1.bf16.msra.mxu0 0
    %1454 = vmatprep.subr.bf16.mxu0 0
    %1455 = vmatpush1.bf16.msra.mxu0 0
    %1456 = vmatprep.subr.bf16.mxu0 0
    %1457 = vmatpush1.bf16.msra.mxu0 0
    %1458 = vmatprep.subr.bf16.mxu0 0
    %1459 = vmatpush1.bf16.msra.mxu0 0
    %1460 = vmatprep.subr.bf16.mxu0 0
    %1461 = vmatpush1.bf16.msra.mxu0 0
    %1462 = vmatprep.subr.bf16.mxu0 0
    %1463 = vmatpush1.bf16.msra.mxu0 0
    %1464 = vmatprep.subr.bf16.mxu0 0
    %1465 = vmatpush1.bf16.msra.mxu0 0
    %1466 = vmatprep.mubr.bf16.mxu0 0
    %1467 = vmatmul.mubr.bf16.gmra.mrb[0].mxu0 %v1432
    %v1468 = vpop.f32.mrb[0].mxu0
    %v1469 = vadd.f32 0.0, %v1468
    %v1470 = vpop.f32.mrb[0].mxu0
    %v1471 = vpop.f32.mrb[0].mxu0
    %v1472 = vpop.f32.mrb[0].mxu0
    %1473 = vdwg.mxu0
    %v1474 = vadd.f32 %v1421, %v1469
    %s1475 = scalar_lea.vmem %s3, 136
    %v1476 = vld [vmem:[%s1475] sm:$0xf]
    %v1477 = vld [vmem:[%s1475 + $0x4] sm:$0xf]
    %v1479 = vrot.slane %v549, 1
    %v1482 = vunpack.c.l.b16 %v1476
    %v1483 = vunpack.c.l.b16 %v1477
    %v1484 = vpack.c.b16 %v1483, %v1482
    %v1487 = vsel %vm560, %v1479, 0
    %1489 = vmatprep.subr.bf16.mxu0 0
    %1490 = vmatpush1.bf16.msra.mxu0 %v1484
    %1491 = vmatprep.subr.bf16.mxu0 0
    %1492 = vmatpush1.bf16.msra.mxu0 0
    %1493 = vmatprep.subr.bf16.mxu0 0
    %1494 = vmatpush1.bf16.msra.mxu0 0
    %1495 = vmatprep.subr.bf16.mxu0 0
    %1496 = vmatpush1.bf16.msra.mxu0 0
    %1497 = vmatprep.subr.bf16.mxu0 0
    %1498 = vmatpush1.bf16.msra.mxu0 0
    %1499 = vmatprep.subr.bf16.mxu0 0
    %1500 = vmatpush1.bf16.msra.mxu0 0
    %1501 = vmatprep.subr.bf16.mxu0 0
    %1502 = vmatpush1.bf16.msra.mxu0 0
    %1503 = vmatprep.subr.bf16.mxu0 0
    %1504 = vmatpush1.bf16.msra.mxu0 0
    %1505 = vmatprep.subr.bf16.mxu0 0
    %1506 = vmatpush1.bf16.msra.mxu0 0
    %1507 = vmatprep.subr.bf16.mxu0 0
    %1508 = vmatpush1.bf16.msra.mxu0 0
    %1509 = vmatprep.subr.bf16.mxu0 0
    %1510 = vmatpush1.bf16.msra.mxu0 0
    %1511 = vmatprep.subr.bf16.mxu0 0
    %1512 = vmatpush1.bf16.msra.mxu0 0
    %1513 = vmatprep.subr.bf16.mxu0 0
    %1514 = vmatpush1.bf16.msra.mxu0 0
    %1515 = vmatprep.subr.bf16.mxu0 0
    %1516 = vmatpush1.bf16.msra.mxu0 0
    %1517 = vmatprep.subr.bf16.mxu0 0
    %1518 = vmatpush1.bf16.msra.mxu0 0
    %1519 = vmatprep.subr.bf16.mxu0 0
    %1520 = vmatpush1.bf16.msra.mxu0 0
    %1521 = vmatprep.mubr.bf16.mxu0 0
    %1522 = vmatmul.mubr.bf16.gmra.mrb[0].mxu0 %v1487
    %v1523 = vpop.f32.mrb[0].mxu0
    %v1524 = vadd.f32 0.0, %v1523
    %v1525 = vpop.f32.mrb[0].mxu0
    %v1526 = vpop.f32.mrb[0].mxu0
    %v1527 = vpop.f32.mrb[0].mxu0
    %1528 = vdwg.mxu0
    %v1529 = vadd.f32 %v1474, %v1524
    %s1530 = scalar_lea.vmem %s3, 144
    %v1531 = vld [vmem:[%s1530] sm:$0xf]
    %v1532 = vld [vmem:[%s1530 + $0x4] sm:$0xf]
    %v1533 = vrot.slane %v549, 2
    %v1536 = vunpack.c.l.b16 %v1531
    %v1537 = vunpack.c.l.b16 %v1532
    %v1538 = vpack.c.b16 %v1537, %v1536
    %v1541 = vsel %vm560, %v1533, 0
    %1543 = vmatprep.subr.bf16.mxu0 0
    %1544 = vmatpush1.bf16.msra.mxu0 %v1538
    %1545 = vmatprep.subr.bf16.mxu0 0
    %1546 = vmatpush1.bf16.msra.mxu0 0
    %1547 = vmatprep.subr.bf16.mxu0 0
    %1548 = vmatpush1.bf16.msra.mxu0 0
    %1549 = vmatprep.subr.bf16.mxu0 0
    %1550 = vmatpush1.bf16.msra.mxu0 0
    %1551 = vmatprep.subr.bf16.mxu0 0
    %1552 = vmatpush1.bf16.msra.mxu0 0
    %1553 = vmatprep.subr.bf16.mxu0 0
    %1554 = vmatpush1.bf16.msra.mxu0 0
    %1555 = vmatprep.subr.bf16.mxu0 0
    %1556 = vmatpush1.bf16.msra.mxu0 0
    %1557 = vmatprep.subr.bf16.mxu0 0
    %1558 = vmatpush1.bf16.msra.mxu0 0
    %1559 = vmatprep.subr.bf16.mxu0 0
    %1560 = vmatpush1.bf16.msra.mxu0 0
    %1561 = vmatprep.subr.bf16.mxu0 0
    %1562 = vmatpush1.bf16.msra.mxu0 0
    %1563 = vmatprep.subr.bf16.mxu0 0
    %1564 = vmatpush1.bf16.msra.mxu0 0
    %1565 = vmatprep.subr.bf16.mxu0 0
    %1566 = vmatpush1.bf16.msra.mxu0 0
    %1567 = vmatprep.subr.bf16.mxu0 0
    %1568 = vmatpush1.bf16.msra.mxu0 0
    %1569 = vmatprep.subr.bf16.mxu0 0
    %1570 = vmatpush1.bf16.msra.mxu0 0
    %1571 = vmatprep.subr.bf16.mxu0 0
    %1572 = vmatpush1.bf16.msra.mxu0 0
    %1573 = vmatprep.subr.bf16.mxu0 0
    %1574 = vmatpush1.bf16.msra.mxu0 0
    %1575 = vmatprep.mubr.bf16.mxu0 0
    %1576 = vmatmul.mubr.bf16.gmra.mrb[0].mxu0 %v1541
    %v1577 = vpop.f32.mrb[0].mxu0
    %v1578 = vadd.f32 0.0, %v1577
    %v1579 = vpop.f32.mrb[0].mxu0
    %v1580 = vpop.f32.mrb[0].mxu0
    %v1581 = vpop.f32.mrb[0].mxu0
    %1582 = vdwg.mxu0
    %v1583 = vadd.f32 %v1529, %v1578
    %s1584 = scalar_lea.vmem %s3, 152
    %v1585 = vld [vmem:[%s1584] sm:$0xf]
    %v1586 = vld [vmem:[%s1584 + $0x4] sm:$0xf]
    %v1587 = vrot.slane %v549, 3
    %v1590 = vunpack.c.l.b16 %v1585
    %v1591 = vunpack.c.l.b16 %v1586
    %v1592 = vpack.c.b16 %v1591, %v1590
    %v1595 = vsel %vm560, %v1587, 0
    %1597 = vmatprep.subr.bf16.mxu0 0
    %1598 = vmatpush1.bf16.msra.mxu0 %v1592
    %1599 = vmatprep.subr.bf16.mxu0 0
    %1600 = vmatpush1.bf16.msra.mxu0 0
    %1601 = vmatprep.subr.bf16.mxu0 0
    %1602 = vmatpush1.bf16.msra.mxu0 0
    %1603 = vmatprep.subr.bf16.mxu0 0
    %1604 = vmatpush1.bf16.msra.mxu0 0
    %1605 = vmatprep.subr.bf16.mxu0 0
    %1606 = vmatpush1.bf16.msra.mxu0 0
    %1607 = vmatprep.subr.bf16.mxu0 0
    %1608 = vmatpush1.bf16.msra.mxu0 0
    %1609 = vmatprep.subr.bf16.mxu0 0
    %1610 = vmatpush1.bf16.msra.mxu0 0
    %1611 = vmatprep.subr.bf16.mxu0 0
    %1612 = vmatpush1.bf16.msra.mxu0 0
    %1613 = vmatprep.subr.bf16.mxu0 0
    %1614 = vmatpush1.bf16.msra.mxu0 0
    %1615 = vmatprep.subr.bf16.mxu0 0
    %1616 = vmatpush1.bf16.msra.mxu0 0
    %1617 = vmatprep.subr.bf16.mxu0 0
    %1618 = vmatpush1.bf16.msra.mxu0 0
    %1619 = vmatprep.subr.bf16.mxu0 0
    %1620 = vmatpush1.bf16.msra.mxu0 0
    %1621 = vmatprep.subr.bf16.mxu0 0
    %1622 = vmatpush1.bf16.msra.mxu0 0
    %1623 = vmatprep.subr.bf16.mxu0 0
    %1624 = vmatpush1.bf16.msra.mxu0 0
    %1625 = vmatprep.subr.bf16.mxu0 0
    %1626 = vmatpush1.bf16.msra.mxu0 0
    %1627 = vmatprep.subr.bf16.mxu0 0
    %1628 = vmatpush1.bf16.msra.mxu0 0
    %1629 = vmatprep.mubr.bf16.mxu0 0
    %1630 = vmatmul.mubr.bf16.gmra.mrb[0].mxu0 %v1595
    %v1631 = vpop.f32.mrb[0].mxu0
    %v1632 = vadd.f32 0.0, %v1631
    %v1633 = vpop.f32.mrb[0].mxu0
    %v1634 = vpop.f32.mrb[0].mxu0
    %v1635 = vpop.f32.mrb[0].mxu0
    %1636 = vdwg.mxu0
    %v1637 = vadd.f32 %v1583, %v1632
    %s1638 = scalar_lea.vmem %s3, 160
    %v1639 = vld [vmem:[%s1638] sm:$0xf]
    %v1640 = vld [vmem:[%s1638 + $0x4] sm:$0xf]
    %v1641 = vrot.slane %v549, 4
    %v1644 = vunpack.c.l.b16 %v1639
    %v1645 = vunpack.c.l.b16 %v1640
    %v1646 = vpack.c.b16 %v1645, %v1644
    %v1649 = vsel %vm560, %v1641, 0
    %1651 = vmatprep.subr.bf16.mxu0 0
    %1652 = vmatpush1.bf16.msra.mxu0 %v1646
    %1653 = vmatprep.subr.bf16.mxu0 0
    %1654 = vmatpush1.bf16.msra.mxu0 0
    %1655 = vmatprep.subr.bf16.mxu0 0
    %1656 = vmatpush1.bf16.msra.mxu0 0
    %1657 = vmatprep.subr.bf16.mxu0 0
    %1658 = vmatpush1.bf16.msra.mxu0 0
    %1659 = vmatprep.subr.bf16.mxu0 0
    %1660 = vmatpush1.bf16.msra.mxu0 0
    %1661 = vmatprep.subr.bf16.mxu0 0
    %1662 = vmatpush1.bf16.msra.mxu0 0
    %1663 = vmatprep.subr.bf16.mxu0 0
    %1664 = vmatpush1.bf16.msra.mxu0 0
    %1665 = vmatprep.subr.bf16.mxu0 0
    %1666 = vmatpush1.bf16.msra.mxu0 0
    %1667 = vmatprep.subr.bf16.mxu0 0
    %1668 = vmatpush1.bf16.msra.mxu0 0
    %1669 = vmatprep.subr.bf16.mxu0 0
    %1670 = vmatpush1.bf16.msra.mxu0 0
    %1671 = vmatprep.subr.bf16.mxu0 0
    %1672 = vmatpush1.bf16.msra.mxu0 0
    %1673 = vmatprep.subr.bf16.mxu0 0
    %1674 = vmatpush1.bf16.msra.mxu0 0
    %1675 = vmatprep.subr.bf16.mxu0 0
    %1676 = vmatpush1.bf16.msra.mxu0 0
    %1677 = vmatprep.subr.bf16.mxu0 0
    %1678 = vmatpush1.bf16.msra.mxu0 0
    %1679 = vmatprep.subr.bf16.mxu0 0
    %1680 = vmatpush1.bf16.msra.mxu0 0
    %1681 = vmatprep.subr.bf16.mxu0 0
    %1682 = vmatpush1.bf16.msra.mxu0 0
    %1683 = vmatprep.mubr.bf16.mxu0 0
    %1684 = vmatmul.mubr.bf16.gmra.mrb[0].mxu0 %v1649
    %v1685 = vpop.f32.mrb[0].mxu0
    %v1686 = vadd.f32 0.0, %v1685
    %v1687 = vpop.f32.mrb[0].mxu0
    %v1688 = vpop.f32.mrb[0].mxu0
    %v1689 = vpop.f32.mrb[0].mxu0
    %1690 = vdwg.mxu0
    %v1691 = vadd.f32 %v1637, %v1686
    %s1692 = scalar_lea.vmem %s3, 168
    %v1693 = vld [vmem:[%s1692] sm:$0xf]
    %v1694 = vld [vmem:[%s1692 + $0x4] sm:$0xf]
    %v1695 = vrot.slane %v549, 5
    %v1698 = vunpack.c.l.b16 %v1693
    %v1699 = vunpack.c.l.b16 %v1694
    %v1700 = vpack.c.b16 %v1699, %v1698
    %v1703 = vsel %vm560, %v1695, 0
    %1705 = vmatprep.subr.bf16.mxu0 0
    %1706 = vmatpush1.bf16.msra.mxu0 %v1700
    %1707 = vmatprep.subr.bf16.mxu0 0
    %1708 = vmatpush1.bf16.msra.mxu0 0
    %1709 = vmatprep.subr.bf16.mxu0 0
    %1710 = vmatpush1.bf16.msra.mxu0 0
    %1711 = vmatprep.subr.bf16.mxu0 0
    %1712 = vmatpush1.bf16.msra.mxu0 0
    %1713 = vmatprep.subr.bf16.mxu0 0
    %1714 = vmatpush1.bf16.msra.mxu0 0
    %1715 = vmatprep.subr.bf16.mxu0 0
    %1716 = vmatpush1.bf16.msra.mxu0 0
    %1717 = vmatprep.subr.bf16.mxu0 0
    %1718 = vmatpush1.bf16.msra.mxu0 0
    %1719 = vmatprep.subr.bf16.mxu0 0
    %1720 = vmatpush1.bf16.msra.mxu0 0
    %1721 = vmatprep.subr.bf16.mxu0 0
    %1722 = vmatpush1.bf16.msra.mxu0 0
    %1723 = vmatprep.subr.bf16.mxu0 0
    %1724 = vmatpush1.bf16.msra.mxu0 0
    %1725 = vmatprep.subr.bf16.mxu0 0
    %1726 = vmatpush1.bf16.msra.mxu0 0
    %1727 = vmatprep.subr.bf16.mxu0 0
    %1728 = vmatpush1.bf16.msra.mxu0 0
    %1729 = vmatprep.subr.bf16.mxu0 0
    %1730 = vmatpush1.bf16.msra.mxu0 0
    %1731 = vmatprep.subr.bf16.mxu0 0
    %1732 = vmatpush1.bf16.msra.mxu0 0
    %1733 = vmatprep.subr.bf16.mxu0 0
    %1734 = vmatpush1.bf16.msra.mxu0 0
    %1735 = vmatprep.subr.bf16.mxu0 0
    %1736 = vmatpush1.bf16.msra.mxu0 0
    %1737 = vmatprep.mubr.bf16.mxu0 0
    %1738 = vmatmul.mubr.bf16.gmra.mrb[0].mxu0 %v1703
    %v1739 = vpop.f32.mrb[0].mxu0
    %v1740 = vadd.f32 0.0, %v1739
    %v1741 = vpop.f32.mrb[0].mxu0
    %v1742 = vpop.f32.mrb[0].mxu0
    %v1743 = vpop.f32.mrb[0].mxu0
    %1744 = vdwg.mxu0
    %v1745 = vadd.f32 %v1691, %v1740
    %s1746 = scalar_lea.vmem %s3, 176
    %v1747 = vld [vmem:[%s1746] sm:$0xf]
    %v1748 = vld [vmem:[%s1746 + $0x4] sm:$0xf]
    %v1749 = vrot.slane %v549, 6
    %v1752 = vunpack.c.l.b16 %v1747
    %v1753 = vunpack.c.l.b16 %v1748
    %v1754 = vpack.c.b16 %v1753, %v1752
    %v1757 = vsel %vm560, %v1749, 0
    %1759 = vmatprep.subr.bf16.mxu0 0
    %1760 = vmatpush1.bf16.msra.mxu0 %v1754
    %1761 = vmatprep.subr.bf16.mxu0 0
    %1762 = vmatpush1.bf16.msra.mxu0 0
    %1763 = vmatprep.subr.bf16.mxu0 0
    %1764 = vmatpush1.bf16.msra.mxu0 0
    %1765 = vmatprep.subr.bf16.mxu0 0
    %1766 = vmatpush1.bf16.msra.mxu0 0
    %1767 = vmatprep.subr.bf16.mxu0 0
    %1768 = vmatpush1.bf16.msra.mxu0 0
    %1769 = vmatprep.subr.bf16.mxu0 0
    %1770 = vmatpush1.bf16.msra.mxu0 0
    %1771 = vmatprep.subr.bf16.mxu0 0
    %1772 = vmatpush1.bf16.msra.mxu0 0
    %1773 = vmatprep.subr.bf16.mxu0 0
    %1774 = vmatpush1.bf16.msra.mxu0 0
    %1775 = vmatprep.subr.bf16.mxu0 0
    %1776 = vmatpush1.bf16.msra.mxu0 0
    %1777 = vmatprep.subr.bf16.mxu0 0
    %1778 = vmatpush1.bf16.msra.mxu0 0
    %1779 = vmatprep.subr.bf16.mxu0 0
    %1780 = vmatpush1.bf16.msra.mxu0 0
    %1781 = vmatprep.subr.bf16.mxu0 0
    %1782 = vmatpush1.bf16.msra.mxu0 0
    %1783 = vmatprep.subr.bf16.mxu0 0
    %1784 = vmatpush1.bf16.msra.mxu0 0
    %1785 = vmatprep.subr.bf16.mxu0 0
    %1786 = vmatpush1.bf16.msra.mxu0 0
    %1787 = vmatprep.subr.bf16.mxu0 0
    %1788 = vmatpush1.bf16.msra.mxu0 0
    %1789 = vmatprep.subr.bf16.mxu0 0
    %1790 = vmatpush1.bf16.msra.mxu0 0
    %1791 = vmatprep.mubr.bf16.mxu0 0
    %1792 = vmatmul.mubr.bf16.gmra.mrb[0].mxu0 %v1757
    %v1793 = vpop.f32.mrb[0].mxu0
    %v1794 = vadd.f32 0.0, %v1793
    %v1795 = vpop.f32.mrb[0].mxu0
    %v1796 = vpop.f32.mrb[0].mxu0
    %v1797 = vpop.f32.mrb[0].mxu0
    %1798 = vdwg.mxu0
    %v1799 = vadd.f32 %v1745, %v1794
    %s1800 = scalar_lea.vmem %s3, 184
    %v1801 = vld [vmem:[%s1800] sm:$0xf]
    %v1802 = vld [vmem:[%s1800 + $0x4] sm:$0xf]
    %v1803 = vrot.slane %v549, 7
    %v1806 = vunpack.c.l.b16 %v1801
    %v1807 = vunpack.c.l.b16 %v1802
    %v1808 = vpack.c.b16 %v1807, %v1806
    %v1811 = vsel %vm560, %v1803, 0
    %1813 = vmatprep.subr.bf16.mxu0 0
    %1814 = vmatpush1.bf16.msra.mxu0 %v1808
    %1815 = vmatprep.subr.bf16.mxu0 0
    %1816 = vmatpush1.bf16.msra.mxu0 0
    %1817 = vmatprep.subr.bf16.mxu0 0
    %1818 = vmatpush1.bf16.msra.mxu0 0
    %1819 = vmatprep.subr.bf16.mxu0 0
    %1820 = vmatpush1.bf16.msra.mxu0 0
    %1821 = vmatprep.subr.bf16.mxu0 0
    %1822 = vmatpush1.bf16.msra.mxu0 0
    %1823 = vmatprep.subr.bf16.mxu0 0
    %1824 = vmatpush1.bf16.msra.mxu0 0
    %1825 = vmatprep.subr.bf16.mxu0 0
    %1826 = vmatpush1.bf16.msra.mxu0 0
    %1827 = vmatprep.subr.bf16.mxu0 0
    %1828 = vmatpush1.bf16.msra.mxu0 0
    %1829 = vmatprep.subr.bf16.mxu0 0
    %1830 = vmatpush1.bf16.msra.mxu0 0
    %1831 = vmatprep.subr.bf16.mxu0 0
    %1832 = vmatpush1.bf16.msra.mxu0 0
    %1833 = vmatprep.subr.bf16.mxu0 0
    %1834 = vmatpush1.bf16.msra.mxu0 0
    %1835 = vmatprep.subr.bf16.mxu0 0
    %1836 = vmatpush1.bf16.msra.mxu0 0
    %1837 = vmatprep.subr.bf16.mxu0 0
    %1838 = vmatpush1.bf16.msra.mxu0 0
    %1839 = vmatprep.subr.bf16.mxu0 0
    %1840 = vmatpush1.bf16.msra.mxu0 0
    %1841 = vmatprep.subr.bf16.mxu0 0
    %1842 = vmatpush1.bf16.msra.mxu0 0
    %1843 = vmatprep.subr.bf16.mxu0 0
    %1844 = vmatpush1.bf16.msra.mxu0 0
    %1845 = vmatprep.mubr.bf16.mxu0 0
    %1846 = vmatmul.mubr.bf16.gmra.mrb[0].mxu0 %v1811
    %v1847 = vpop.f32.mrb[0].mxu0
    %v1848 = vadd.f32 0.0, %v1847
    %v1849 = vpop.f32.mrb[0].mxu0
    %v1850 = vpop.f32.mrb[0].mxu0
    %v1851 = vpop.f32.mrb[0].mxu0
    %1852 = vdwg.mxu0
    %v1853 = vadd.f32 %v1799, %v1848
    %s1854 = scalar_lea.vmem %s3, 192
    %v1855 = vld [vmem:[%s1854] sm:$0xf]
    %v1856 = vld [vmem:[%s1854 + $0x4] sm:$0xf]
    %v1859 = vunpack.c.l.b16 %v1855
    %v1860 = vunpack.c.l.b16 %v1856
    %v1861 = vpack.c.b16 %v1860, %v1859
    %v1864 = vsel %vm560, %v550, 0
    %1866 = vmatprep.subr.bf16.mxu0 0
    %1867 = vmatpush1.bf16.msra.mxu0 %v1861
    %1868 = vmatprep.subr.bf16.mxu0 0
    %1869 = vmatpush1.bf16.msra.mxu0 0
    %1870 = vmatprep.subr.bf16.mxu0 0
    %1871 = vmatpush1.bf16.msra.mxu0 0
    %1872 = vmatprep.subr.bf16.mxu0 0
    %1873 = vmatpush1.bf16.msra.mxu0 0
    %1874 = vmatprep.subr.bf16.mxu0 0
    %1875 = vmatpush1.bf16.msra.mxu0 0
    %1876 = vmatprep.subr.bf16.mxu0 0
    %1877 = vmatpush1.bf16.msra.mxu0 0
    %1878 = vmatprep.subr.bf16.mxu0 0
    %1879 = vmatpush1.bf16.msra.mxu0 0
    %1880 = vmatprep.subr.bf16.mxu0 0
    %1881 = vmatpush1.bf16.msra.mxu0 0
    %1882 = vmatprep.subr.bf16.mxu0 0
    %1883 = vmatpush1.bf16.msra.mxu0 0
    %1884 = vmatprep.subr.bf16.mxu0 0
    %1885 = vmatpush1.bf16.msra.mxu0 0
    %1886 = vmatprep.subr.bf16.mxu0 0
    %1887 = vmatpush1.bf16.msra.mxu0 0
    %1888 = vmatprep.subr.bf16.mxu0 0
    %1889 = vmatpush1.bf16.msra.mxu0 0
    %1890 = vmatprep.subr.bf16.mxu0 0
    %1891 = vmatpush1.bf16.msra.mxu0 0
    %1892 = vmatprep.subr.bf16.mxu0 0
    %1893 = vmatpush1.bf16.msra.mxu0 0
    %1894 = vmatprep.subr.bf16.mxu0 0
    %1895 = vmatpush1.bf16.msra.mxu0 0
    %1896 = vmatprep.subr.bf16.mxu0 0
    %1897 = vmatpush1.bf16.msra.mxu0 0
    %1898 = vmatprep.mubr.bf16.mxu0 0
    %1899 = vmatmul.mubr.bf16.gmra.mrb[0].mxu0 %v1864
    %v1900 = vpop.f32.mrb[0].mxu0
    %v1901 = vadd.f32 0.0, %v1900
    %v1902 = vpop.f32.mrb[0].mxu0
    %v1903 = vpop.f32.mrb[0].mxu0
    %v1904 = vpop.f32.mrb[0].mxu0
    %1905 = vdwg.mxu0
    %v1906 = vadd.f32 %v1853, %v1901
    %v1907 = vtanh.pop %v1906
    %v1908 = vpack.c.bf16 %v1907, %v1907
    %v1909 = vld [vmem:[%s5] sm:$0xf]
    %v1910 = vld [vmem:[%s5 + $0x4] sm:$0xf]
    %v1911 = vld [vmem:[%s5 + $0x8] sm:$0xf]
    %v1912 = vld [vmem:[%s5 + $0xc] sm:$0xf]
    %v1913 = vld [vmem:[%s5 + $0x10] sm:$0xf]
    %v1914 = vld [vmem:[%s5 + $0x14] sm:$0xf]
    %v1915 = vld [vmem:[%s5 + $0x18] sm:$0xf]
    %v1916 = vld [vmem:[%s5 + $0x1c] sm:$0xf]
    %v1917 = vld [vmem:[%s5 + $0x20] sm:$0xf]
    %v1918 = vld [vmem:[%s5 + $0x24] sm:$0xf]
    %v1919 = vld [vmem:[%s5 + $0x28] sm:$0xf]
    %v1920 = vld [vmem:[%s5 + $0x2c] sm:$0xf]
    %v1921 = vld [vmem:[%s5 + $0x30] sm:$0xf]
    %v1922 = vld [vmem:[%s5 + $0x34] sm:$0xf]
    %v1923 = vld [vmem:[%s5 + $0x38] sm:$0xf]
    %v1924 = vld [vmem:[%s6] sm:$0x1]
    %v1926 = vlaneseq
    %v1927 = vshrl.u32 %v1926, 7
    %v1928 = vsub.s32 0, %v1927
    %v1929 = vrot.slane %v1924, %v1928
    %v1946 = vunpack.c.l.b16 %v1909
    %v1947 = vunpack.c.l.b16 %v1910
    %v1948 = vunpack.c.l.b16 %v1911
    %v1949 = vunpack.c.l.b16 %v1912
    %v1950 = vunpack.c.l.b16 %v1913
    %v1951 = vunpack.c.l.b16 %v1914
    %v1952 = vunpack.c.l.b16 %v1915
    %v1953 = vunpack.c.l.b16 %v1916
    %v1954 = vunpack.c.l.b16 %v1917
    %v1955 = vunpack.c.l.b16 %v1918
    %v1956 = vunpack.c.l.b16 %v1919
    %v1957 = vunpack.c.l.b16 %v1920
    %v1958 = vunpack.c.l.b16 %v1921
    %v1959 = vunpack.c.l.b16 %v1922
    %v1960 = vunpack.c.l.b16 %v1923
    %v1961 = vpack.c.b16 %v1947, %v1946
    %v1962 = vpack.c.b16 %v1949, %v1948
    %v1963 = vpack.c.b16 %v1951, %v1950
    %v1964 = vpack.c.b16 %v1953, %v1952
    %v1965 = vpack.c.b16 %v1955, %v1954
    %v1966 = vpack.c.b16 %v1957, %v1956
    %v1967 = vpack.c.b16 %v1959, %v1958
    %v1968 = vpack.c.b16 %v1960, %v1960
    %vm1976 = vcmask 982016
    %v1978 = vsel %vm1976, %v1908, 0
    %vm1980 = vcmask 1043456
    %v1982 = vsel %vm1980, %v1968, 0
    %1984 = vmatprep.subr.bf16.mxu0 0
    %1985 = vmatpush1.bf16.msra.mxu0 %v1961
    %1986 = vmatprep.subr.bf16.mxu0 0
    %1987 = vmatpush1.bf16.msra.mxu0 %v1962
    %1988 = vmatprep.subr.bf16.mxu0 0
    %1989 = vmatpush1.bf16.msra.mxu0 %v1963
    %1990 = vmatprep.subr.bf16.mxu0 0
    %1991 = vmatpush1.bf16.msra.mxu0 %v1964
    %1992 = vmatprep.subr.bf16.mxu0 0
    %1993 = vmatpush1.bf16.msra.mxu0 %v1965
    %1994 = vmatprep.subr.bf16.mxu0 0
    %1995 = vmatpush1.bf16.msra.mxu0 %v1966
    %1996 = vmatprep.subr.bf16.mxu0 0
    %1997 = vmatpush1.bf16.msra.mxu0 %v1967
    %1998 = vmatprep.subr.bf16.mxu0 0
    %1999 = vmatpush1.bf16.msra.mxu0 %v1982
    %2000 = vmatprep.subr.bf16.mxu0 0
    %2001 = vmatpush1.bf16.msra.mxu0 0
    %2002 = vmatprep.subr.bf16.mxu0 0
    %2003 = vmatpush1.bf16.msra.mxu0 0
    %2004 = vmatprep.subr.bf16.mxu0 0
    %2005 = vmatpush1.bf16.msra.mxu0 0
    %2006 = vmatprep.subr.bf16.mxu0 0
    %2007 = vmatpush1.bf16.msra.mxu0 0
    %2008 = vmatprep.subr.bf16.mxu0 0
    %2009 = vmatpush1.bf16.msra.mxu0 0
    %2010 = vmatprep.subr.bf16.mxu0 0
    %2011 = vmatpush1.bf16.msra.mxu0 0
    %2012 = vmatprep.subr.bf16.mxu0 0
    %2013 = vmatpush1.bf16.msra.mxu0 0
    %2014 = vmatprep.subr.bf16.mxu0 0
    %2015 = vmatpush1.bf16.msra.mxu0 0
    %2016 = vmatprep.mubr.bf16.mxu0 0
    %2017 = vmatmul.mubr.bf16.gmra.mrb[0].mxu0 %v1978
    %v2018 = vpop.f32.mrb[0].mxu0
    %v2019 = vadd.f32 %v1929, %v2018
    %v2020 = vpop.f32.mrb[0].mxu0
    %v2021 = vpop.f32.mrb[0].mxu0
    %v2022 = vpop.f32.mrb[0].mxu0
    %2023 = vdwg.mxu0
    %v2024 = vtanh.pop %v2019
    %v2025 = vpack.c.bf16 %v2024, %v2024
    %v2026 = vld [vmem:[%s7] sm:$0xf]
    %v2027 = vld [vmem:[%s7 + $0x4] sm:$0xf]
    %v2028 = vld [vmem:[%s7 + $0x8] sm:$0xf]
    %v2029 = vld [vmem:[%s7 + $0xc] sm:$0xf]
    %v2030 = vld [vmem:[%s7 + $0x10] sm:$0xf]
    %v2031 = vld [vmem:[%s7 + $0x14] sm:$0xf]
    %v2032 = vld [vmem:[%s7 + $0x18] sm:$0xf]
    %v2033 = vld [vmem:[%s7 + $0x1c] sm:$0xf]
    %v2034 = vld [vmem:[%s7 + $0x20] sm:$0xf]
    %v2035 = vld [vmem:[%s7 + $0x24] sm:$0xf]
    %v2036 = vld [vmem:[%s7 + $0x28] sm:$0x3]
    %v2037 = vld [vmem:[%s8] sm:$0x1]
    %v2039 = vlaneseq
    %v2040 = vshrl.u32 %v2039, 7
    %v2041 = vsub.s32 0, %v2040
    %v2042 = vrot.slane %v2037, %v2041
    %v2055 = vunpack.c.l.b16 %v2026
    %v2056 = vunpack.c.l.b16 %v2027
    %v2057 = vunpack.c.l.b16 %v2028
    %v2058 = vunpack.c.l.b16 %v2029
    %v2059 = vunpack.c.l.b16 %v2030
    %v2060 = vunpack.c.l.b16 %v2031
    %v2061 = vunpack.c.l.b16 %v2032
    %v2062 = vunpack.c.l.b16 %v2033
    %v2063 = vunpack.c.l.b16 %v2034
    %v2064 = vunpack.c.l.b16 %v2035
    %v2065 = vunpack.c.l.b16 %v2036
    %v2066 = vpack.c.b16 %v2056, %v2055
    %v2067 = vpack.c.b16 %v2058, %v2057
    %v2068 = vpack.c.b16 %v2060, %v2059
    %v2069 = vpack.c.b16 %v2062, %v2061
    %v2070 = vpack.c.b16 %v2064, %v2063
    %v2071 = vpack.c.b16 %v2065, %v2065
    %vm2077 = vcmask 687104
    %v2079 = vsel %vm2077, %v2025, 0
    %vm2081 = vcmask 1041408
    %v2083 = vsel %vm2081, %v2071, 0
    %2085 = vmatprep.subr.bf16.mxu0 0
    %2086 = vmatpush1.bf16.msra.mxu0 %v2066
    %2087 = vmatprep.subr.bf16.mxu0 0
    %2088 = vmatpush1.bf16.msra.mxu0 %v2067
    %2089 = vmatprep.subr.bf16.mxu0 0
    %2090 = vmatpush1.bf16.msra.mxu0 %v2068
    %2091 = vmatprep.subr.bf16.mxu0 0
    %2092 = vmatpush1.bf16.msra.mxu0 %v2069
    %2093 = vmatprep.subr.bf16.mxu0 0
    %2094 = vmatpush1.bf16.msra.mxu0 %v2070
    %2095 = vmatprep.subr.bf16.mxu0 0
    %2096 = vmatpush1.bf16.msra.mxu0 %v2083
    %2097 = vmatprep.subr.bf16.mxu0 0
    %2098 = vmatpush1.bf16.msra.mxu0 0
    %2099 = vmatprep.subr.bf16.mxu0 0
    %2100 = vmatpush1.bf16.msra.mxu0 0
    %2101 = vmatprep.subr.bf16.mxu0 0
    %2102 = vmatpush1.bf16.msra.mxu0 0
    %2103 = vmatprep.subr.bf16.mxu0 0
    %2104 = vmatpush1.bf16.msra.mxu0 0
    %2105 = vmatprep.subr.bf16.mxu0 0
    %2106 = vmatpush1.bf16.msra.mxu0 0
    %2107 = vmatprep.subr.bf16.mxu0 0
    %2108 = vmatpush1.bf16.msra.mxu0 0
    %2109 = vmatprep.subr.bf16.mxu0 0
    %2110 = vmatpush1.bf16.msra.mxu0 0
    %2111 = vmatprep.subr.bf16.mxu0 0
    %2112 = vmatpush1.bf16.msra.mxu0 0
    %2113 = vmatprep.subr.bf16.mxu0 0
    %2114 = vmatpush1.bf16.msra.mxu0 0
    %2115 = vmatprep.subr.bf16.mxu0 0
    %2116 = vmatpush1.bf16.msra.mxu0 0
    %2117 = vmatprep.mubr.bf16.mxu0 0
    %2118 = vmatmul.mubr.bf16.gmra.mrb[0].mxu0 %v2079
    %v2119 = vpop.f32.mrb[0].mxu0
    %v2120 = vadd.f32 %v2042, %v2119
    %v2121 = vpop.f32.mrb[0].mxu0
    %v2122 = vpop.f32.mrb[0].mxu0
    %v2123 = vpop.f32.mrb[0].mxu0
    %2124 = vdwg.mxu0
    %vm2125 = vcmask 74752
    %2126 = vst.msk [vmem:[#allocation2] sm:$0x3] %vm2125, %v2120
    // Predicated region
    $region38: #{lenet5_forward.3} parent=1 // pred_check
      _
    $region39: #{lenet5_forward.3} parent=1 // pred_check_branch
      %2128 = sbr.rel (0) target = $region41
    $region40: #{lenet5_forward.3} parent=1 // pred_region
      %s2130 = ssub.s32 32, 32
      %2131 = vsyncadd [#allocation3], %s2130
      %s2133 = sshll.u32 [#allocation2], 4
      %s2134 = int_to_ptr.vmem [resolvable:$true] %s2133
      %2136 = dma.vmem_to_hbm [thread:$0]  %s2134, 32, %s9, [#allocation3]
    $region41: #{lenet5_forward.3} parent=1 // pred_fallthru
      _
    // Predicated region
    $region42: #{lenet5_forward.3} parent=1 // pred_check
      _
    $region43: #{lenet5_forward.3} parent=1 // pred_check_branch
      %2138 = sbr.rel (0) target = $region45
    $region44: #{lenet5_forward.3} parent=1 // pred_region
      %2139 = dma.done [#allocation3], 32
    $region45: #{lenet5_forward.3} parent=1 // pred_fallthru
      _
    %2140 = vsyncpa [#allocation3], 1

</llo_original>
